<compile_context>
chip_gen: v6e
topology: v6e:2x2x1
jax: 0.10.0
libtpu: 0.0.40
codegen_flags: <defaults>
</compile_context>

<pallas_src>
import jax
import jax.numpy as jnp
from jax.experimental import pallas as pl
from jax.experimental.pallas import tpu as pltpu

# ---- module hyperparameters (mirrors the PyTorch script) -------------------
hidden_size = 128
text = 'hello this is a simple next character prediction example. it is fun!'
chars = sorted(set(text))
input_size = len(chars)
output_size = len(chars)

_SUBLANE = 8
_LANE = 128
_IN_ALIGN = 32   # sublane alignment for w_ih rows; covers f32 (8) and bf16 (16) packing


def _round_up(n, m):
    return ((n + m - 1) // m) * m


def _sigmoid(x):
    # sigmoid(x) == 0.5 * tanh(0.5 * x) + 0.5  → single EUP op per gate
    # (vs exp + reciprocal), per performance review.
    return 0.5 * jnp.tanh(0.5 * x) + 0.5


# ---- Pallas kernel: full LSTM recurrence + final Linear --------------------
def lstm_kernel(x_ref, wih_ref, whh_ref, b_ref, wfc_ref, bfc_ref,
                out_ref, xproj_scr):
    # x_ref:     (T*B, Ip)  time-major input, flattened over (t, b)
    # wih_ref:   (Ip, 4H)   W_ih^T   (Ip = I padded to 32 sublanes)
    # whh_ref:   (H, 4H)    W_hh^T
    # b_ref:     (1, 4H)    b_ih + b_hh   (f32)
    # wfc_ref:   (H, Op)    W_fc^T   (Op = O padded to 128 lanes)
    # bfc_ref:   (1, Op)    (f32)
    # out_ref:   (B, Op)    (B padded to 8 sublanes)
    # xproj_scr: (T*B, 4H)  f32 scratch for the hoisted input projection
    H = whh_ref.shape[0]
    B = out_ref.shape[0]
    T = x_ref.shape[0] // B
    cd = whh_ref.dtype  # MXU operand dtype (bf16 default, or f32)

    # (1) Hoisted input projection: ONE MXU matmul for all timesteps,
    #     bias broadcast added once (outside the recurrence).
    xproj_scr[...] = (
        jnp.dot(x_ref[...], wih_ref[...], preferred_element_type=jnp.float32)
        + b_ref[...])

    # (2) Serial recurrence, fully unrolled (T is static and tiny).
    #     h/c carried as values so they live in vregs, not VMEM scratch.
    # TODO(synk): make W_hh weight-stationary across the 8 steps via
    # pltpu.matmul_push_rhs / matmul_acc_lhs / matmul_pop once verified with a
    # bundle dump (review flagged this as the largest per-step win).
    h = jnp.zeros((B, H), jnp.float32)
    c = jnp.zeros((B, H), jnp.float32)
    for t in range(T):
        gates = xproj_scr[t * B:(t + 1) * B, :] + jnp.dot(
            h.astype(cd), whh_ref[...], preferred_element_type=jnp.float32)
        i_g = _sigmoid(gates[:, 0 * H:1 * H])
        f_g = _sigmoid(gates[:, 1 * H:2 * H])
        g_g = jnp.tanh(gates[:, 2 * H:3 * H])
        o_g = _sigmoid(gates[:, 3 * H:4 * H])
        c = f_g * c + i_g * g_g
        h = o_g * jnp.tanh(c)

    # (3) fc on the last hidden state (lane-dense padded Op -> unmasked store).
    out_ref[...] = (
        jnp.dot(h.astype(wfc_ref.dtype), wfc_ref[...],
                preferred_element_type=jnp.float32)
        + bfc_ref[...]).astype(out_ref.dtype)


# ---- wrapper: prepare weights ONCE, return jitted forward -------------------
def make_lstm_forward(params, *, compute_dtype=jnp.bfloat16):
    """Pads/casts static weights exactly once and returns forward(x).

    compute_dtype=bfloat16 (default) feeds the MXU bf16 operands with f32
    accumulation; pass jnp.float32 for exact module numerics (1e-4 parity).
    """
    I = params["w_ih_t"].shape[0]
    H = params["w_hh_t"].shape[0]
    O = params["w_fc_t"].shape[1]

    Ip = _round_up(I, _IN_ALIGN)     # input features: sublane alignment only
    Op = _round_up(O, _LANE)         # output features: lane-dense

    # --- done once, NOT per forward call ---
    w_ih = jnp.pad(params["w_ih_t"], ((0, Ip - I), (0, 0))).astype(compute_dtype)
    w_hh = params["w_hh_t"].astype(compute_dtype)
    bias = (params["b_ih"] + params["b_hh"]).reshape(1, 4 * H).astype(jnp.float32)
    w_fc = jnp.pad(params["w_fc_t"], ((0, 0), (0, Op - O))).astype(compute_dtype)
    b_fc = jnp.pad(params["b_fc"], ((0, Op - O),)).reshape(1, Op).astype(jnp.float32)

    vmem = pl.BlockSpec(memory_space=pltpu.MemorySpace.VMEM)

    @jax.jit
    def forward(x):
        B, T, _ = x.shape
        Bp = _round_up(max(B, _SUBLANE), _SUBLANE)   # batch -> full sublane group

        # time-major, zero-pad batch & feature dims, flatten (T,Bp,Ip)->(T*Bp,Ip)
        x_tm = jnp.transpose(x, (1, 0, 2))
        x_tm = jnp.pad(x_tm, ((0, 0), (0, Bp - B), (0, Ip - I)))
        x2d = x_tm.reshape(T * Bp, Ip).astype(compute_dtype)

        # TODO(synk): if B ever grows past ~8-16 padded rows, add a batch-tile
        # grid axis with dimension_semantics=("parallel",) so v7x's two
        # TensorCores split it; pointless at B=2.
        out_padded = pl.pallas_call(
            lstm_kernel,
            out_shape=jax.ShapeDtypeStruct((Bp, Op), jnp.float32),
            in_specs=[vmem] * 6,
            out_specs=vmem,
            scratch_shapes=[pltpu.VMEM((T * Bp, 4 * H), jnp.float32)],
        )(x2d, w_ih, w_hh, bias, w_fc, b_fc)

        return out_padded[:B, :O]

    return forward


# ---- pure-JAX reference (for correctness check) -----------------------------
def lstm_model_reference(x, params):
    B, T, I = x.shape
    H = params["w_hh_t"].shape[0]
    bias = params["b_ih"] + params["b_hh"]

    def step(carry, xt):
        h, c = carry
        gates = xt @ params["w_ih_t"] + h @ params["w_hh_t"] + bias
        i_g = jax.nn.sigmoid(gates[:, 0:H])
        f_g = jax.nn.sigmoid(gates[:, H:2 * H])
        g_g = jnp.tanh(gates[:, 2 * H:3 * H])
        o_g = jax.nn.sigmoid(gates[:, 3 * H:4 * H])
        c = f_g * c + i_g * g_g
        h = o_g * jnp.tanh(c)
        return (h, c), None

    h0 = jnp.zeros((B, H), jnp.float32)
    c0 = jnp.zeros((B, H), jnp.float32)
    (h, _), _ = jax.lax.scan(step, (h0, c0), jnp.transpose(x, (1, 0, 2)))
    return h @ params["w_fc_t"] + params["b_fc"]


# ---- deterministic parameter init (PyTorch-style uniform(-1/sqrt(H), +)) ----
def init_params(key, I, H, O):
    ks = jax.random.split(key, 6)
    s = 1.0 / jnp.sqrt(H)
    return {
        # stored pre-transposed relative to PyTorch: (I, 4H), (H, 4H), (H, O)
        "w_ih_t": jax.random.uniform(ks[0], (I, 4 * H), jnp.float32, -s, s),
        "w_hh_t": jax.random.uniform(ks[1], (H, 4 * H), jnp.float32, -s, s),
        "b_ih":   jax.random.uniform(ks[2], (4 * H,), jnp.float32, -s, s),
        "b_hh":   jax.random.uniform(ks[3], (4 * H,), jnp.float32, -s, s),
        "w_fc_t": jax.random.uniform(ks[4], (H, O), jnp.float32, -s, s),
        "b_fc":   jax.random.uniform(ks[5], (O,), jnp.float32, -s, s),
    }


if __name__ == "__main__":
    key = jax.random.PRNGKey(0)
    k_x, k_p = jax.random.split(key)

    B, T = 2, 8
    x = jax.random.normal(k_x, (B, T, input_size), jnp.float32)
    params = init_params(k_p, input_size, hidden_size, output_size)

    ref = lstm_model_reference(x, params)

    # Default path: bf16 MXU operands (f32 accumulation) — relaxed tolerance.
    fwd_bf16 = make_lstm_forward(params)                      # compute_dtype=bf16
    out = jax.block_until_ready(fwd_bf16(x))
    assert out.shape == (B, output_size)
    assert jnp.allclose(out, ref, atol=1e-1, rtol=1e-1), "bf16 mismatch vs reference"

    # Exact path: f32 operands preserve the module's numerics at 1e-4.
    fwd_f32 = make_lstm_forward(params, compute_dtype=jnp.float32)
    out_f32 = jax.block_until_ready(fwd_f32(x))
    assert out_f32.shape == (B, output_size)
    assert jnp.allclose(out_f32, ref, atol=1e-4, rtol=1e-4), "f32 mismatch vs reference"

    print("KERNEL_OK")
</pallas_src>

<mosaic_0001>
module attributes {stable_mosaic.version = 11 : i64} {
  func.func @lstm_kernel(%arg0: memref<64x32xbf16, #tpu.memory_space<vmem>>, %arg1: memref<32x512xbf16, #tpu.memory_space<vmem>>, %arg2: memref<128x512xbf16, #tpu.memory_space<vmem>>, %arg3: memref<1x512xf32, #tpu.memory_space<vmem>>, %arg4: memref<128x128xbf16, #tpu.memory_space<vmem>>, %arg5: memref<1x128xf32, #tpu.memory_space<vmem>>, %arg6: memref<8x128xf32, #tpu.memory_space<vmem>>, %arg7: memref<64x512xf32, #tpu.memory_space<vmem>>) attributes {dimension_semantics = [], scalar_prefetch = 0 : i64, scratch_operands = 1 : i64, tpu.core_type = #tpu.core_type<tc>} {
    %c0 = arith.constant 0 : index
    %c0_0 = arith.constant 0 : index
    %0 = vector.load %arg0[%c0, %c0_0] : memref<64x32xbf16, #tpu.memory_space<vmem>>, vector<64x32xbf16>
    %c0_1 = arith.constant 0 : index
    %c0_2 = arith.constant 0 : index
    %1 = vector.load %arg1[%c0_1, %c0_2] : memref<32x512xbf16, #tpu.memory_space<vmem>>, vector<32x512xbf16>
    %cst = arith.constant dense<0.000000e+00> : vector<64x512xf32>
    %2 = tpu.matmul %0, %1, %cst {dimension_numbers = #tpu.dot_dimension_numbers<[1], [0], [0], [1], [0, 0, 1, 1], [], []>} : vector<64x32xbf16>, vector<32x512xbf16>, vector<64x512xf32> -> vector<64x512xf32>
    %c0_3 = arith.constant 0 : index
    %c0_4 = arith.constant 0 : index
    %3 = vector.load %arg3[%c0_3, %c0_4] : memref<1x512xf32, #tpu.memory_space<vmem>>, vector<1x512xf32>
    %4 = vector.broadcast %3 : vector<1x512xf32> to vector<64x512xf32>
    %5 = arith.addf %2, %4 : vector<64x512xf32>
    %c0_5 = arith.constant 0 : index
    %c0_6 = arith.constant 0 : index
    %6 = vector.load %arg7[%c0_5, %c0_6] : memref<64x512xf32, #tpu.memory_space<vmem>>, vector<64x512xf32>
    tpu.vector_store %arg7[%c0_5, %c0_6], %5 {strides = array<i32>} : memref<64x512xf32, #tpu.memory_space<vmem>>, vector<64x512xf32>,
    %cst_7 = arith.constant 0.000000e+00 : f32
    %7 = vector.broadcast %cst_7 : f32 to vector<8x128xf32>
    %cst_8 = arith.constant 0.000000e+00 : f32
    %8 = vector.broadcast %cst_8 : f32 to vector<8x128xf32>
    %c0_9 = arith.constant 0 : index
    %c0_10 = arith.constant 0 : index
    %9 = vector.load %arg7[%c0_9, %c0_10] : memref<64x512xf32, #tpu.memory_space<vmem>>, vector<8x512xf32>
    %10 = arith.truncf %7 : vector<8x128xf32> to vector<8x128xbf16>
    %c0_11 = arith.constant 0 : index
    %c0_12 = arith.constant 0 : index
    %11 = vector.load %arg2[%c0_11, %c0_12] : memref<128x512xbf16, #tpu.memory_space<vmem>>, vector<128x512xbf16>
    %cst_13 = arith.constant dense<0.000000e+00> : vector<8x512xf32>
    %12 = tpu.matmul %10, %11, %cst_13 {dimension_numbers = #tpu.dot_dimension_numbers<[1], [0], [0], [1], [0, 0, 1, 1], [], []>} : vector<8x128xbf16>, vector<128x512xbf16>, vector<8x512xf32> -> vector<8x512xf32>
    %13 = arith.addf %9, %12 : vector<8x512xf32>
    %14 = vector.extract_strided_slice %13 {offsets = [0, 0], sizes = [8, 128], strides = [1, 1]} : vector<8x512xf32> to vector<8x128xf32>
    %cst_14 = arith.constant 5.000000e-01 : f32
    %15 = vector.broadcast %cst_14 : f32 to vector<8x128xf32>
    %16 = arith.mulf %15, %14 : vector<8x128xf32>
    %17 = math.tanh %16 : vector<8x128xf32>
    %cst_15 = arith.constant 5.000000e-01 : f32
    %18 = vector.broadcast %cst_15 : f32 to vector<8x128xf32>
    %19 = arith.mulf %18, %17 : vector<8x128xf32>
    %cst_16 = arith.constant 5.000000e-01 : f32
    %20 = vector.broadcast %cst_16 : f32 to vector<8x128xf32>
    %21 = arith.addf %19, %20 : vector<8x128xf32>
    %22 = vector.extract_strided_slice %13 {offsets = [0, 128], sizes = [8, 128], strides = [1, 1]} : vector<8x512xf32> to vector<8x128xf32>
    %cst_17 = arith.constant 5.000000e-01 : f32
    %23 = vector.broadcast %cst_17 : f32 to vector<8x128xf32>
    %24 = arith.mulf %23, %22 : vector<8x128xf32>
    %25 = math.tanh %24 : vector<8x128xf32>
    %cst_18 = arith.constant 5.000000e-01 : f32
    %26 = vector.broadcast %cst_18 : f32 to vector<8x128xf32>
    %27 = arith.mulf %26, %25 : vector<8x128xf32>
    %cst_19 = arith.constant 5.000000e-01 : f32
    %28 = vector.broadcast %cst_19 : f32 to vector<8x128xf32>
    %29 = arith.addf %27, %28 : vector<8x128xf32>
    %30 = vector.extract_strided_slice %13 {offsets = [0, 256], sizes = [8, 128], strides = [1, 1]} : vector<8x512xf32> to vector<8x128xf32>
    %31 = math.tanh %30 : vector<8x128xf32>
    %32 = vector.extract_strided_slice %13 {offsets = [0, 384], sizes = [8, 128], strides = [1, 1]} : vector<8x512xf32> to vector<8x128xf32>
    %cst_20 = arith.constant 5.000000e-01 : f32
    %33 = vector.broadcast %cst_20 : f32 to vector<8x128xf32>
    %34 = arith.mulf %33, %32 : vector<8x128xf32>
    %35 = math.tanh %34 : vector<8x128xf32>
    %cst_21 = arith.constant 5.000000e-01 : f32
    %36 = vector.broadcast %cst_21 : f32 to vector<8x128xf32>
    %37 = arith.mulf %36, %35 : vector<8x128xf32>
    %cst_22 = arith.constant 5.000000e-01 : f32
    %38 = vector.broadcast %cst_22 : f32 to vector<8x128xf32>
    %39 = arith.addf %37, %38 : vector<8x128xf32>
    %40 = arith.mulf %29, %8 : vector<8x128xf32>
    %41 = arith.mulf %21, %31 : vector<8x128xf32>
    %42 = arith.addf %40, %41 : vector<8x128xf32>
    %43 = math.tanh %42 : vector<8x128xf32>
    %44 = arith.mulf %39, %43 : vector<8x128xf32>
    %c8 = arith.constant 8 : index
    %c0_23 = arith.constant 0 : index
    %45 = vector.load %arg7[%c8, %c0_23] : memref<64x512xf32, #tpu.memory_space<vmem>>, vector<8x512xf32>
    %46 = arith.truncf %44 : vector<8x128xf32> to vector<8x128xbf16>
    %c0_24 = arith.constant 0 : index
    %c0_25 = arith.constant 0 : index
    %47 = vector.load %arg2[%c0_24, %c0_25] : memref<128x512xbf16, #tpu.memory_space<vmem>>, vector<128x512xbf16>
    %cst_26 = arith.constant dense<0.000000e+00> : vector<8x512xf32>
    %48 = tpu.matmul %46, %47, %cst_26 {dimension_numbers = #tpu.dot_dimension_numbers<[1], [0], [0], [1], [0, 0, 1, 1], [], []>} : vector<8x128xbf16>, vector<128x512xbf16>, vector<8x512xf32> -> vector<8x512xf32>
    %49 = arith.addf %45, %48 : vector<8x512xf32>
    %50 = vector.extract_strided_slice %49 {offsets = [0, 0], sizes = [8, 128], strides = [1, 1]} : vector<8x512xf32> to vector<8x128xf32>
    %cst_27 = arith.constant 5.000000e-01 : f32
    %51 = vector.broadcast %cst_27 : f32 to vector<8x128xf32>
    %52 = arith.mulf %51, %50 : vector<8x128xf32>
    %53 = math.tanh %52 : vector<8x128xf32>
    %cst_28 = arith.constant 5.000000e-01 : f32
    %54 = vector.broadcast %cst_28 : f32 to vector<8x128xf32>
    %55 = arith.mulf %54, %53 : vector<8x128xf32>
    %cst_29 = arith.constant 5.000000e-01 : f32
    %56 = vector.broadcast %cst_29 : f32 to vector<8x128xf32>
    %57 = arith.addf %55, %56 : vector<8x128xf32>
    %58 = vector.extract_strided_slice %49 {offsets = [0, 128], sizes = [8, 128], strides = [1, 1]} : vector<8x512xf32> to vector<8x128xf32>
    %cst_30 = arith.constant 5.000000e-01 : f32
    %59 = vector.broadcast %cst_30 : f32 to vector<8x128xf32>
    %60 = arith.mulf %59, %58 : vector<8x128xf32>
    %61 = math.tanh %60 : vector<8x128xf32>
    %cst_31 = arith.constant 5.000000e-01 : f32
    %62 = vector.broadcast %cst_31 : f32 to vector<8x128xf32>
    %63 = arith.mulf %62, %61 : vector<8x128xf32>
    %cst_32 = arith.constant 5.000000e-01 : f32
    %64 = vector.broadcast %cst_32 : f32 to vector<8x128xf32>
    %65 = arith.addf %63, %64 : vector<8x128xf32>
    %66 = vector.extract_strided_slice %49 {offsets = [0, 256], sizes = [8, 128], strides = [1, 1]} : vector<8x512xf32> to vector<8x128xf32>
    %67 = math.tanh %66 : vector<8x128xf32>
    %68 = vector.extract_strided_slice %49 {offsets = [0, 384], sizes = [8, 128], strides = [1, 1]} : vector<8x512xf32> to vector<8x128xf32>
    %cst_33 = arith.constant 5.000000e-01 : f32
    %69 = vector.broadcast %cst_33 : f32 to vector<8x128xf32>
    %70 = arith.mulf %69, %68 : vector<8x128xf32>
    %71 = math.tanh %70 : vector<8x128xf32>
    %cst_34 = arith.constant 5.000000e-01 : f32
    %72 = vector.broadcast %cst_34 : f32 to vector<8x128xf32>
    %73 = arith.mulf %72, %71 : vector<8x128xf32>
    %cst_35 = arith.constant 5.000000e-01 : f32
    %74 = vector.broadcast %cst_35 : f32 to vector<8x128xf32>
    %75 = arith.addf %73, %74 : vector<8x128xf32>
    %76 = arith.mulf %65, %42 : vector<8x128xf32>
    %77 = arith.mulf %57, %67 : vector<8x128xf32>
    %78 = arith.addf %76, %77 : vector<8x128xf32>
    %79 = math.tanh %78 : vector<8x128xf32>
    %80 = arith.mulf %75, %79 : vector<8x128xf32>
    %c16 = arith.constant 16 : index
    %c0_36 = arith.constant 0 : index
    %81 = vector.load %arg7[%c16, %c0_36] : memref<64x512xf32, #tpu.memory_space<vmem>>, vector<8x512xf32>
    %82 = arith.truncf %80 : vector<8x128xf32> to vector<8x128xbf16>
    %c0_37 = arith.constant 0 : index
    %c0_38 = arith.constant 0 : index
    %83 = vector.load %arg2[%c0_37, %c0_38] : memref<128x512xbf16, #tpu.memory_space<vmem>>, vector<128x512xbf16>
    %cst_39 = arith.constant dense<0.000000e+00> : vector<8x512xf32>
    %84 = tpu.matmul %82, %83, %cst_39 {dimension_numbers = #tpu.dot_dimension_numbers<[1], [0], [0], [1], [0, 0, 1, 1], [], []>} : vector<8x128xbf16>, vector<128x512xbf16>, vector<8x512xf32> -> vector<8x512xf32>
    %85 = arith.addf %81, %84 : vector<8x512xf32>
    %86 = vector.extract_strided_slice %85 {offsets = [0, 0], sizes = [8, 128], strides = [1, 1]} : vector<8x512xf32> to vector<8x128xf32>
    %cst_40 = arith.constant 5.000000e-01 : f32
    %87 = vector.broadcast %cst_40 : f32 to vector<8x128xf32>
    %88 = arith.mulf %87, %86 : vector<8x128xf32>
    %89 = math.tanh %88 : vector<8x128xf32>
    %cst_41 = arith.constant 5.000000e-01 : f32
    %90 = vector.broadcast %cst_41 : f32 to vector<8x128xf32>
    %91 = arith.mulf %90, %89 : vector<8x128xf32>
    %cst_42 = arith.constant 5.000000e-01 : f32
    %92 = vector.broadcast %cst_42 : f32 to vector<8x128xf32>
    %93 = arith.addf %91, %92 : vector<8x128xf32>
    %94 = vector.extract_strided_slice %85 {offsets = [0, 128], sizes = [8, 128], strides = [1, 1]} : vector<8x512xf32> to vector<8x128xf32>
    %cst_43 = arith.constant 5.000000e-01 : f32
    %95 = vector.broadcast %cst_43 : f32 to vector<8x128xf32>
    %96 = arith.mulf %95, %94 : vector<8x128xf32>
    %97 = math.tanh %96 : vector<8x128xf32>
    %cst_44 = arith.constant 5.000000e-01 : f32
    %98 = vector.broadcast %cst_44 : f32 to vector<8x128xf32>
    %99 = arith.mulf %98, %97 : vector<8x128xf32>
    %cst_45 = arith.constant 5.000000e-01 : f32
    %100 = vector.broadcast %cst_45 : f32 to vector<8x128xf32>
    %101 = arith.addf %99, %100 : vector<8x128xf32>
    %102 = vector.extract_strided_slice %85 {offsets = [0, 256], sizes = [8, 128], strides = [1, 1]} : vector<8x512xf32> to vector<8x128xf32>
    %103 = math.tanh %102 : vector<8x128xf32>
    %104 = vector.extract_strided_slice %85 {offsets = [0, 384], sizes = [8, 128], strides = [1, 1]} : vector<8x512xf32> to vector<8x128xf32>
    %cst_46 = arith.constant 5.000000e-01 : f32
    %105 = vector.broadcast %cst_46 : f32 to vector<8x128xf32>
    %106 = arith.mulf %105, %104 : vector<8x128xf32>
    %107 = math.tanh %106 : vector<8x128xf32>
    %cst_47 = arith.constant 5.000000e-01 : f32
    %108 = vector.broadcast %cst_47 : f32 to vector<8x128xf32>
    %109 = arith.mulf %108, %107 : vector<8x128xf32>
    %cst_48 = arith.constant 5.000000e-01 : f32
    %110 = vector.broadcast %cst_48 : f32 to vector<8x128xf32>
    %111 = arith.addf %109, %110 : vector<8x128xf32>
    %112 = arith.mulf %101, %78 : vector<8x128xf32>
    %113 = arith.mulf %93, %103 : vector<8x128xf32>
    %114 = arith.addf %112, %113 : vector<8x128xf32>
    %115 = math.tanh %114 : vector<8x128xf32>
    %116 = arith.mulf %111, %115 : vector<8x128xf32>
    %c24 = arith.constant 24 : index
    %c0_49 = arith.constant 0 : index
    %117 = vector.load %arg7[%c24, %c0_49] : memref<64x512xf32, #tpu.memory_space<vmem>>, vector<8x512xf32>
    %118 = arith.truncf %116 : vector<8x128xf32> to vector<8x128xbf16>
    %c0_50 = arith.constant 0 : index
    %c0_51 = arith.constant 0 : index
    %119 = vector.load %arg2[%c0_50, %c0_51] : memref<128x512xbf16, #tpu.memory_space<vmem>>, vector<128x512xbf16>
    %cst_52 = arith.constant dense<0.000000e+00> : vector<8x512xf32>
    %120 = tpu.matmul %118, %119, %cst_52 {dimension_numbers = #tpu.dot_dimension_numbers<[1], [0], [0], [1], [0, 0, 1, 1], [], []>} : vector<8x128xbf16>, vector<128x512xbf16>, vector<8x512xf32> -> vector<8x512xf32>
    %121 = arith.addf %117, %120 : vector<8x512xf32>
    %122 = vector.extract_strided_slice %121 {offsets = [0, 0], sizes = [8, 128], strides = [1, 1]} : vector<8x512xf32> to vector<8x128xf32>
    %cst_53 = arith.constant 5.000000e-01 : f32
    %123 = vector.broadcast %cst_53 : f32 to vector<8x128xf32>
    %124 = arith.mulf %123, %122 : vector<8x128xf32>
    %125 = math.tanh %124 : vector<8x128xf32>
    %cst_54 = arith.constant 5.000000e-01 : f32
    %126 = vector.broadcast %cst_54 : f32 to vector<8x128xf32>
    %127 = arith.mulf %126, %125 : vector<8x128xf32>
    %cst_55 = arith.constant 5.000000e-01 : f32
    %128 = vector.broadcast %cst_55 : f32 to vector<8x128xf32>
    %129 = arith.addf %127, %128 : vector<8x128xf32>
    %130 = vector.extract_strided_slice %121 {offsets = [0, 128], sizes = [8, 128], strides = [1, 1]} : vector<8x512xf32> to vector<8x128xf32>
    %cst_56 = arith.constant 5.000000e-01 : f32
    %131 = vector.broadcast %cst_56 : f32 to vector<8x128xf32>
    %132 = arith.mulf %131, %130 : vector<8x128xf32>
    %133 = math.tanh %132 : vector<8x128xf32>
    %cst_57 = arith.constant 5.000000e-01 : f32
    %134 = vector.broadcast %cst_57 : f32 to vector<8x128xf32>
    %135 = arith.mulf %134, %133 : vector<8x128xf32>
    %cst_58 = arith.constant 5.000000e-01 : f32
    %136 = vector.broadcast %cst_58 : f32 to vector<8x128xf32>
    %137 = arith.addf %135, %136 : vector<8x128xf32>
    %138 = vector.extract_strided_slice %121 {offsets = [0, 256], sizes = [8, 128], strides = [1, 1]} : vector<8x512xf32> to vector<8x128xf32>
    %139 = math.tanh %138 : vector<8x128xf32>
    %140 = vector.extract_strided_slice %121 {offsets = [0, 384], sizes = [8, 128], strides = [1, 1]} : vector<8x512xf32> to vector<8x128xf32>
    %cst_59 = arith.constant 5.000000e-01 : f32
    %141 = vector.broadcast %cst_59 : f32 to vector<8x128xf32>
    %142 = arith.mulf %141, %140 : vector<8x128xf32>
    %143 = math.tanh %142 : vector<8x128xf32>
    %cst_60 = arith.constant 5.000000e-01 : f32
    %144 = vector.broadcast %cst_60 : f32 to vector<8x128xf32>
    %145 = arith.mulf %144, %143 : vector<8x128xf32>
    %cst_61 = arith.constant 5.000000e-01 : f32
    %146 = vector.broadcast %cst_61 : f32 to vector<8x128xf32>
    %147 = arith.addf %145, %146 : vector<8x128xf32>
    %148 = arith.mulf %137, %114 : vector<8x128xf32>
    %149 = arith.mulf %129, %139 : vector<8x128xf32>
    %150 = arith.addf %148, %149 : vector<8x128xf32>
    %151 = math.tanh %150 : vector<8x128xf32>
    %152 = arith.mulf %147, %151 : vector<8x128xf32>
    %c32 = arith.constant 32 : index
    %c0_62 = arith.constant 0 : index
    %153 = vector.load %arg7[%c32, %c0_62] : memref<64x512xf32, #tpu.memory_space<vmem>>, vector<8x512xf32>
    %154 = arith.truncf %152 : vector<8x128xf32> to vector<8x128xbf16>
    %c0_63 = arith.constant 0 : index
    %c0_64 = arith.constant 0 : index
    %155 = vector.load %arg2[%c0_63, %c0_64] : memref<128x512xbf16, #tpu.memory_space<vmem>>, vector<128x512xbf16>
    %cst_65 = arith.constant dense<0.000000e+00> : vector<8x512xf32>
    %156 = tpu.matmul %154, %155, %cst_65 {dimension_numbers = #tpu.dot_dimension_numbers<[1], [0], [0], [1], [0, 0, 1, 1], [], []>} : vector<8x128xbf16>, vector<128x512xbf16>, vector<8x512xf32> -> vector<8x512xf32>
    %157 = arith.addf %153, %156 : vector<8x512xf32>
    %158 = vector.extract_strided_slice %157 {offsets = [0, 0], sizes = [8, 128], strides = [1, 1]} : vector<8x512xf32> to vector<8x128xf32>
    %cst_66 = arith.constant 5.000000e-01 : f32
    %159 = vector.broadcast %cst_66 : f32 to vector<8x128xf32>
    %160 = arith.mulf %159, %158 : vector<8x128xf32>
    %161 = math.tanh %160 : vector<8x128xf32>
    %cst_67 = arith.constant 5.000000e-01 : f32
    %162 = vector.broadcast %cst_67 : f32 to vector<8x128xf32>
    %163 = arith.mulf %162, %161 : vector<8x128xf32>
    %cst_68 = arith.constant 5.000000e-01 : f32
    %164 = vector.broadcast %cst_68 : f32 to vector<8x128xf32>
    %165 = arith.addf %163, %164 : vector<8x128xf32>
    %166 = vector.extract_strided_slice %157 {offsets = [0, 128], sizes = [8, 128], strides = [1, 1]} : vector<8x512xf32> to vector<8x128xf32>
    %cst_69 = arith.constant 5.000000e-01 : f32
    %167 = vector.broadcast %cst_69 : f32 to vector<8x128xf32>
    %168 = arith.mulf %167, %166 : vector<8x128xf32>
    %169 = math.tanh %168 : vector<8x128xf32>
    %cst_70 = arith.constant 5.000000e-01 : f32
    %170 = vector.broadcast %cst_70 : f32 to vector<8x128xf32>
    %171 = arith.mulf %170, %169 : vector<8x128xf32>
    %cst_71 = arith.constant 5.000000e-01 : f32
    %172 = vector.broadcast %cst_71 : f32 to vector<8x128xf32>
    %173 = arith.addf %171, %172 : vector<8x128xf32>
    %174 = vector.extract_strided_slice %157 {offsets = [0, 256], sizes = [8, 128], strides = [1, 1]} : vector<8x512xf32> to vector<8x128xf32>
    %175 = math.tanh %174 : vector<8x128xf32>
    %176 = vector.extract_strided_slice %157 {offsets = [0, 384], sizes = [8, 128], strides = [1, 1]} : vector<8x512xf32> to vector<8x128xf32>
    %cst_72 = arith.constant 5.000000e-01 : f32
    %177 = vector.broadcast %cst_72 : f32 to vector<8x128xf32>
    %178 = arith.mulf %177, %176 : vector<8x128xf32>
    %179 = math.tanh %178 : vector<8x128xf32>
    %cst_73 = arith.constant 5.000000e-01 : f32
    %180 = vector.broadcast %cst_73 : f32 to vector<8x128xf32>
    %181 = arith.mulf %180, %179 : vector<8x128xf32>
    %cst_74 = arith.constant 5.000000e-01 : f32
    %182 = vector.broadcast %cst_74 : f32 to vector<8x128xf32>
    %183 = arith.addf %181, %182 : vector<8x128xf32>
    %184 = arith.mulf %173, %150 : vector<8x128xf32>
    %185 = arith.mulf %165, %175 : vector<8x128xf32>
    %186 = arith.addf %184, %185 : vector<8x128xf32>
    %187 = math.tanh %186 : vector<8x128xf32>
    %188 = arith.mulf %183, %187 : vector<8x128xf32>
    %c40 = arith.constant 40 : index
    %c0_75 = arith.constant 0 : index
    %189 = vector.load %arg7[%c40, %c0_75] : memref<64x512xf32, #tpu.memory_space<vmem>>, vector<8x512xf32>
    %190 = arith.truncf %188 : vector<8x128xf32> to vector<8x128xbf16>
    %c0_76 = arith.constant 0 : index
    %c0_77 = arith.constant 0 : index
    %191 = vector.load %arg2[%c0_76, %c0_77] : memref<128x512xbf16, #tpu.memory_space<vmem>>, vector<128x512xbf16>
    %cst_78 = arith.constant dense<0.000000e+00> : vector<8x512xf32>
    %192 = tpu.matmul %190, %191, %cst_78 {dimension_numbers = #tpu.dot_dimension_numbers<[1], [0], [0], [1], [0, 0, 1, 1], [], []>} : vector<8x128xbf16>, vector<128x512xbf16>, vector<8x512xf32> -> vector<8x512xf32>
    %193 = arith.addf %189, %192 : vector<8x512xf32>
    %194 = vector.extract_strided_slice %193 {offsets = [0, 0], sizes = [8, 128], strides = [1, 1]} : vector<8x512xf32> to vector<8x128xf32>
    %cst_79 = arith.constant 5.000000e-01 : f32
    %195 = vector.broadcast %cst_79 : f32 to vector<8x128xf32>
    %196 = arith.mulf %195, %194 : vector<8x128xf32>
    %197 = math.tanh %196 : vector<8x128xf32>
    %cst_80 = arith.constant 5.000000e-01 : f32
    %198 = vector.broadcast %cst_80 : f32 to vector<8x128xf32>
    %199 = arith.mulf %198, %197 : vector<8x128xf32>
    %cst_81 = arith.constant 5.000000e-01 : f32
    %200 = vector.broadcast %cst_81 : f32 to vector<8x128xf32>
    %201 = arith.addf %199, %200 : vector<8x128xf32>
    %202 = vector.extract_strided_slice %193 {offsets = [0, 128], sizes = [8, 128], strides = [1, 1]} : vector<8x512xf32> to vector<8x128xf32>
    %cst_82 = arith.constant 5.000000e-01 : f32
    %203 = vector.broadcast %cst_82 : f32 to vector<8x128xf32>
    %204 = arith.mulf %203, %202 : vector<8x128xf32>
    %205 = math.tanh %204 : vector<8x128xf32>
    %cst_83 = arith.constant 5.000000e-01 : f32
    %206 = vector.broadcast %cst_83 : f32 to vector<8x128xf32>
    %207 = arith.mulf %206, %205 : vector<8x128xf32>
    %cst_84 = arith.constant 5.000000e-01 : f32
    %208 = vector.broadcast %cst_84 : f32 to vector<8x128xf32>
    %209 = arith.addf %207, %208 : vector<8x128xf32>
    %210 = vector.extract_strided_slice %193 {offsets = [0, 256], sizes = [8, 128], strides = [1, 1]} : vector<8x512xf32> to vector<8x128xf32>
    %211 = math.tanh %210 : vector<8x128xf32>
    %212 = vector.extract_strided_slice %193 {offsets = [0, 384], sizes = [8, 128], strides = [1, 1]} : vector<8x512xf32> to vector<8x128xf32>
    %cst_85 = arith.constant 5.000000e-01 : f32
    %213 = vector.broadcast %cst_85 : f32 to vector<8x128xf32>
    %214 = arith.mulf %213, %212 : vector<8x128xf32>
    %215 = math.tanh %214 : vector<8x128xf32>
    %cst_86 = arith.constant 5.000000e-01 : f32
    %216 = vector.broadcast %cst_86 : f32 to vector<8x128xf32>
    %217 = arith.mulf %216, %215 : vector<8x128xf32>
    %cst_87 = arith.constant 5.000000e-01 : f32
    %218 = vector.broadcast %cst_87 : f32 to vector<8x128xf32>
    %219 = arith.addf %217, %218 : vector<8x128xf32>
    %220 = arith.mulf %209, %186 : vector<8x128xf32>
    %221 = arith.mulf %201, %211 : vector<8x128xf32>
    %222 = arith.addf %220, %221 : vector<8x128xf32>
    %223 = math.tanh %222 : vector<8x128xf32>
    %224 = arith.mulf %219, %223 : vector<8x128xf32>
    %c48 = arith.constant 48 : index
    %c0_88 = arith.constant 0 : index
    %225 = vector.load %arg7[%c48, %c0_88] : memref<64x512xf32, #tpu.memory_space<vmem>>, vector<8x512xf32>
    %226 = arith.truncf %224 : vector<8x128xf32> to vector<8x128xbf16>
    %c0_89 = arith.constant 0 : index
    %c0_90 = arith.constant 0 : index
    %227 = vector.load %arg2[%c0_89, %c0_90] : memref<128x512xbf16, #tpu.memory_space<vmem>>, vector<128x512xbf16>
    %cst_91 = arith.constant dense<0.000000e+00> : vector<8x512xf32>
    %228 = tpu.matmul %226, %227, %cst_91 {dimension_numbers = #tpu.dot_dimension_numbers<[1], [0], [0], [1], [0, 0, 1, 1], [], []>} : vector<8x128xbf16>, vector<128x512xbf16>, vector<8x512xf32> -> vector<8x512xf32>
    %229 = arith.addf %225, %228 : vector<8x512xf32>
    %230 = vector.extract_strided_slice %229 {offsets = [0, 0], sizes = [8, 128], strides = [1, 1]} : vector<8x512xf32> to vector<8x128xf32>
    %cst_92 = arith.constant 5.000000e-01 : f32
    %231 = vector.broadcast %cst_92 : f32 to vector<8x128xf32>
    %232 = arith.mulf %231, %230 : vector<8x128xf32>
    %233 = math.tanh %232 : vector<8x128xf32>
    %cst_93 = arith.constant 5.000000e-01 : f32
    %234 = vector.broadcast %cst_93 : f32 to vector<8x128xf32>
    %235 = arith.mulf %234, %233 : vector<8x128xf32>
    %cst_94 = arith.constant 5.000000e-01 : f32
    %236 = vector.broadcast %cst_94 : f32 to vector<8x128xf32>
    %237 = arith.addf %235, %236 : vector<8x128xf32>
    %238 = vector.extract_strided_slice %229 {offsets = [0, 128], sizes = [8, 128], strides = [1, 1]} : vector<8x512xf32> to vector<8x128xf32>
    %cst_95 = arith.constant 5.000000e-01 : f32
    %239 = vector.broadcast %cst_95 : f32 to vector<8x128xf32>
    %240 = arith.mulf %239, %238 : vector<8x128xf32>
    %241 = math.tanh %240 : vector<8x128xf32>
    %cst_96 = arith.constant 5.000000e-01 : f32
    %242 = vector.broadcast %cst_96 : f32 to vector<8x128xf32>
    %243 = arith.mulf %242, %241 : vector<8x128xf32>
    %cst_97 = arith.constant 5.000000e-01 : f32
    %244 = vector.broadcast %cst_97 : f32 to vector<8x128xf32>
    %245 = arith.addf %243, %244 : vector<8x128xf32>
    %246 = vector.extract_strided_slice %229 {offsets = [0, 256], sizes = [8, 128], strides = [1, 1]} : vector<8x512xf32> to vector<8x128xf32>
    %247 = math.tanh %246 : vector<8x128xf32>
    %248 = vector.extract_strided_slice %229 {offsets = [0, 384], sizes = [8, 128], strides = [1, 1]} : vector<8x512xf32> to vector<8x128xf32>
    %cst_98 = arith.constant 5.000000e-01 : f32
    %249 = vector.broadcast %cst_98 : f32 to vector<8x128xf32>
    %250 = arith.mulf %249, %248 : vector<8x128xf32>
    %251 = math.tanh %250 : vector<8x128xf32>
    %cst_99 = arith.constant 5.000000e-01 : f32
    %252 = vector.broadcast %cst_99 : f32 to vector<8x128xf32>
    %253 = arith.mulf %252, %251 : vector<8x128xf32>
    %cst_100 = arith.constant 5.000000e-01 : f32
    %254 = vector.broadcast %cst_100 : f32 to vector<8x128xf32>
    %255 = arith.addf %253, %254 : vector<8x128xf32>
    %256 = arith.mulf %245, %222 : vector<8x128xf32>
    %257 = arith.mulf %237, %247 : vector<8x128xf32>
    %258 = arith.addf %256, %257 : vector<8x128xf32>
    %259 = math.tanh %258 : vector<8x128xf32>
    %260 = arith.mulf %255, %259 : vector<8x128xf32>
    %c56 = arith.constant 56 : index
    %c0_101 = arith.constant 0 : index
    %261 = vector.load %arg7[%c56, %c0_101] : memref<64x512xf32, #tpu.memory_space<vmem>>, vector<8x512xf32>
    %262 = arith.truncf %260 : vector<8x128xf32> to vector<8x128xbf16>
    %c0_102 = arith.constant 0 : index
    %c0_103 = arith.constant 0 : index
    %263 = vector.load %arg2[%c0_102, %c0_103] : memref<128x512xbf16, #tpu.memory_space<vmem>>, vector<128x512xbf16>
    %cst_104 = arith.constant dense<0.000000e+00> : vector<8x512xf32>
    %264 = tpu.matmul %262, %263, %cst_104 {dimension_numbers = #tpu.dot_dimension_numbers<[1], [0], [0], [1], [0, 0, 1, 1], [], []>} : vector<8x128xbf16>, vector<128x512xbf16>, vector<8x512xf32> -> vector<8x512xf32>
    %265 = arith.addf %261, %264 : vector<8x512xf32>
    %266 = vector.extract_strided_slice %265 {offsets = [0, 0], sizes = [8, 128], strides = [1, 1]} : vector<8x512xf32> to vector<8x128xf32>
    %cst_105 = arith.constant 5.000000e-01 : f32
    %267 = vector.broadcast %cst_105 : f32 to vector<8x128xf32>
    %268 = arith.mulf %267, %266 : vector<8x128xf32>
    %269 = math.tanh %268 : vector<8x128xf32>
    %cst_106 = arith.constant 5.000000e-01 : f32
    %270 = vector.broadcast %cst_106 : f32 to vector<8x128xf32>
    %271 = arith.mulf %270, %269 : vector<8x128xf32>
    %cst_107 = arith.constant 5.000000e-01 : f32
    %272 = vector.broadcast %cst_107 : f32 to vector<8x128xf32>
    %273 = arith.addf %271, %272 : vector<8x128xf32>
    %274 = vector.extract_strided_slice %265 {offsets = [0, 128], sizes = [8, 128], strides = [1, 1]} : vector<8x512xf32> to vector<8x128xf32>
    %cst_108 = arith.constant 5.000000e-01 : f32
    %275 = vector.broadcast %cst_108 : f32 to vector<8x128xf32>
    %276 = arith.mulf %275, %274 : vector<8x128xf32>
    %277 = math.tanh %276 : vector<8x128xf32>
    %cst_109 = arith.constant 5.000000e-01 : f32
    %278 = vector.broadcast %cst_109 : f32 to vector<8x128xf32>
    %279 = arith.mulf %278, %277 : vector<8x128xf32>
    %cst_110 = arith.constant 5.000000e-01 : f32
    %280 = vector.broadcast %cst_110 : f32 to vector<8x128xf32>
    %281 = arith.addf %279, %280 : vector<8x128xf32>
    %282 = vector.extract_strided_slice %265 {offsets = [0, 256], sizes = [8, 128], strides = [1, 1]} : vector<8x512xf32> to vector<8x128xf32>
    %283 = math.tanh %282 : vector<8x128xf32>
    %284 = vector.extract_strided_slice %265 {offsets = [0, 384], sizes = [8, 128], strides = [1, 1]} : vector<8x512xf32> to vector<8x128xf32>
    %cst_111 = arith.constant 5.000000e-01 : f32
    %285 = vector.broadcast %cst_111 : f32 to vector<8x128xf32>
    %286 = arith.mulf %285, %284 : vector<8x128xf32>
    %287 = math.tanh %286 : vector<8x128xf32>
    %cst_112 = arith.constant 5.000000e-01 : f32
    %288 = vector.broadcast %cst_112 : f32 to vector<8x128xf32>
    %289 = arith.mulf %288, %287 : vector<8x128xf32>
    %cst_113 = arith.constant 5.000000e-01 : f32
    %290 = vector.broadcast %cst_113 : f32 to vector<8x128xf32>
    %291 = arith.addf %289, %290 : vector<8x128xf32>
    %292 = arith.mulf %281, %258 : vector<8x128xf32>
    %293 = arith.mulf %273, %283 : vector<8x128xf32>
    %294 = arith.addf %292, %293 : vector<8x128xf32>
    %295 = math.tanh %294 : vector<8x128xf32>
    %296 = arith.mulf %291, %295 : vector<8x128xf32>
    %297 = arith.truncf %296 : vector<8x128xf32> to vector<8x128xbf16>
    %c0_114 = arith.constant 0 : index
    %c0_115 = arith.constant 0 : index
    %298 = vector.load %arg4[%c0_114, %c0_115] : memref<128x128xbf16, #tpu.memory_space<vmem>>, vector<128x128xbf16>
    %cst_116 = arith.constant dense<0.000000e+00> : vector<8x128xf32>
    %299 = tpu.matmul %297, %298, %cst_116 {dimension_numbers = #tpu.dot_dimension_numbers<[1], [0], [0], [1], [0, 0, 1, 1], [], []>} : vector<8x128xbf16>, vector<128x128xbf16>, vector<8x128xf32> -> vector<8x128xf32>
    %c0_117 = arith.constant 0 : index
    %c0_118 = arith.constant 0 : index
    %300 = vector.load %arg5[%c0_117, %c0_118] : memref<1x128xf32, #tpu.memory_space<vmem>>, vector<1x128xf32>
    %301 = vector.broadcast %300 : vector<1x128xf32> to vector<8x128xf32>
    %302 = arith.addf %299, %301 : vector<8x128xf32>
    %c0_119 = arith.constant 0 : index
    %c0_120 = arith.constant 0 : index
    %303 = vector.load %arg6[%c0_119, %c0_120] : memref<8x128xf32, #tpu.memory_space<vmem>>, vector<8x128xf32>
    tpu.vector_store %arg6[%c0_119, %c0_120], %302 {strides = array<i32>} : memref<8x128xf32, #tpu.memory_space<vmem>>, vector<8x128xf32>,
    return
  }
}

</mosaic_0001>

<llo_original>
// kernel: forward.1
$region0: #{forward.1}
  #allocation0 [shape = 'u32[]', space=smem, size = 0x4, offset = 0x4, fixed_abs, tag = 'smem constant byte address 0x4 - core index']
  #allocation1 [shape = 'u32[144,128]{1,0:T(1,128)}', space=vmem, size = 0x12000, scoped, tag = 'internal scratch']
  #allocation2 [shape = 'f32[64,512]{1,0:T(8,128)}', space=vmem, size = 0x20000, scoped, tag = 'scratch operand']
  %s0 = inlined_call_operand.vmem [shape: bf16[64,32], index: 0, kind: input, shape index: {}]
  %s1 = inlined_call_operand.hbm [shape: bf16[32,512], index: 1, kind: input, shape index: {}]
  %s2 = inlined_call_operand.hbm [shape: bf16[128,512], index: 2, kind: input, shape index: {}]
  %s3 = inlined_call_operand.vmem [shape: f32[1,512], index: 3, kind: input, shape index: {}]
  %s4 = inlined_call_operand.vmem [shape: bf16[128,128], index: 4, kind: input, shape index: {}]
  %s5 = inlined_call_operand.vmem [shape: f32[1,128], index: 5, kind: input, shape index: {}]
  %s6 = inlined_call_operand.vmem [shape: f32[8,128], index: 6, kind: output, shape index: {}]
  %s7 = sld [smem:[#allocation0]]
  $region42: #{forward.1} parent=0
    _
  %s9 = ssub.s32 1, %s7
  %s10 = scalar_select 0, %s9, %s7
  $region1: #{forward.1} parent=0
    #allocation3 [shape = 'u8[32768]{0}', space=vmem, size = 0x8000, scoped, tag = 'input window, operand 1, single buffered']
    #allocation4 [shape = 's32[1]{0}', space=sflag, size = 0x4, scoped, tag = 'scoped memory for forward.1']
    #allocation5 [shape = 'u8[131072]{0}', space=vmem, size = 0x20000, scoped, tag = 'input window, operand 2, single buffered']
    #allocation6 [shape = 's32[1]{0}', space=sflag, size = 0x4, scoped, tag = 'scoped memory for forward.1']
    %11 = vsyncpa [#allocation4], 0
    %12 = vsyncpa [#allocation6], 0
    // Predicated region
    $region2: #{forward.1} parent=1 // pred_check
      _
    $region3: #{forward.1} parent=1 // pred_check_branch
      %14 = sbr.rel (0) target = $region5
    $region4: #{forward.1} parent=1 // pred_region
      _
    $region5: #{forward.1} parent=1 // pred_fallthru
      _
    // Predicated region
    $region6: #{forward.1} parent=1 // pred_check
      _
    $region7: #{forward.1} parent=1 // pred_check_branch
      %16 = sbr.rel (0) target = $region9
    $region8: #{forward.1} parent=1 // pred_region
      %s18 = ssub.s32 1024, 1024
      %19 = vsyncadd [#allocation4], %s18
      %s20 = sshll.u32 [#allocation3], 4
      %s21 = int_to_ptr.vmem [resolvable:$true] %s20
      %26 = dma.hbm_to_vmem [thread:$0]  %s1, 1024, %s21, [#allocation4], 256, 256, 16
    $region9: #{forward.1} parent=1 // pred_fallthru
      _
    // Predicated region
    $region10: #{forward.1} parent=1 // pred_check
      _
    $region11: #{forward.1} parent=1 // pred_check_branch
      %28 = sbr.rel (0) target = $region13
    $region12: #{forward.1} parent=1 // pred_region
      %s30 = ssub.s32 4096, 4096
      %31 = vsyncadd [#allocation6], %s30
      %s32 = sshll.u32 [#allocation5], 4
      %s33 = int_to_ptr.vmem [resolvable:$true] %s32
      %38 = dma.hbm_to_vmem [thread:$0]  %s2, 4096, %s33, [#allocation6], 256, 256, 16
    $region13: #{forward.1} parent=1 // pred_fallthru
      _
    // Predicated region
    $region14: #{forward.1} parent=1 // pred_check
      _
    $region15: #{forward.1} parent=1 // pred_check_branch
      %40 = sbr.rel (0) target = $region17
    $region16: #{forward.1} parent=1 // pred_region
      _
    $region17: #{forward.1} parent=1 // pred_fallthru
      _
    // Predicated region
    $region18: #{forward.1} parent=1 // pred_check
      _
    $region19: #{forward.1} parent=1 // pred_check_branch
      %42 = sbr.rel (0) target = $region21
    $region20: #{forward.1} parent=1 // pred_region
      _
    $region21: #{forward.1} parent=1 // pred_fallthru
      _
    // Predicated region
    $region22: #{forward.1} parent=1 // pred_check
      _
    $region23: #{forward.1} parent=1 // pred_check_branch
      %44 = sbr.rel (0) target = $region25
    $region24: #{forward.1} parent=1 // pred_region
      _
    $region25: #{forward.1} parent=1 // pred_fallthru
      _
    // Predicated region
    $region26: #{forward.1} parent=1 // pred_check
      _
    $region27: #{forward.1} parent=1 // pred_check_branch
      %46 = sbr.rel (0) target = $region29
    $region28: #{forward.1} parent=1 // pred_region
      %47 = dma.done [#allocation4], 1024
    $region29: #{forward.1} parent=1 // pred_fallthru
      _
    // Predicated region
    $region30: #{forward.1} parent=1 // pred_check
      _
    $region31: #{forward.1} parent=1 // pred_check_branch
      %49 = sbr.rel (0) target = $region33
    $region32: #{forward.1} parent=1 // pred_region
      %50 = dma.done [#allocation6], 4096
    $region33: #{forward.1} parent=1 // pred_fallthru
      _
    %v52 = vld [vmem:[%s0] sm:$0xf]
    %v53 = vld [vmem:[%s0 + $0x4] sm:$0xf]
    %v54 = vld [vmem:[%s0 + $0x8] sm:$0xf]
    %v55 = vld [vmem:[%s0 + $0xc] sm:$0xf]
    %v56 = vld [vmem:[%s0 + $0x10] sm:$0xf]
    %v57 = vld [vmem:[%s0 + $0x14] sm:$0xf]
    %v58 = vld [vmem:[%s0 + $0x18] sm:$0xf]
    %v59 = vld [vmem:[%s0 + $0x1c] sm:$0xf]
    %v60 = vld [vmem:[#allocation3] sm:$0xff]
    %v61 = vld [vmem:[#allocation3 + $0x8] sm:$0xff]
    %v62 = vld [vmem:[#allocation3 + $0x10] sm:$0xff]
    %v63 = vld [vmem:[#allocation3 + $0x18] sm:$0xff]
    %v64 = vld [vmem:[#allocation3 + $0x20] sm:$0xff]
    %v65 = vld [vmem:[#allocation3 + $0x28] sm:$0xff]
    %v66 = vld [vmem:[#allocation3 + $0x30] sm:$0xff]
    %v67 = vld [vmem:[#allocation3 + $0x38] sm:$0xff]
    %v68 = vld [vmem:[%s3] sm:$0xf]
    %v70 = vlaneseq
    %v71 = vshrl.u32 %v70, 7
    %v72 = vsub.s32 0, %v71
    %v73 = vrot.slane %v68, %v72
    %v74 = vlaneseq
    %v75 = vshrl.u32 %v74, 7
    %v76 = vsub.s32 1, %v75
    %v77 = vrot.slane %v68, %v76
    %v78 = vlaneseq
    %v79 = vshrl.u32 %v78, 7
    %v80 = vsub.s32 2, %v79
    %v81 = vrot.slane %v68, %v80
    %v82 = vlaneseq
    %v83 = vshrl.u32 %v82, 7
    %v84 = vsub.s32 3, %v83
    %v85 = vrot.slane %v68, %v84
    %v98 = vunpack.c.l.b16 %v52
    %v99 = vunpack.c.l.b16 %v53
    %v100 = vunpack.c.l.b16 %v54
    %v101 = vunpack.c.l.b16 %v55
    %v102 = vunpack.c.l.b16 %v56
    %v103 = vunpack.c.l.b16 %v57
    %v104 = vunpack.c.l.b16 %v58
    %v105 = vunpack.c.l.b16 %v59
    %v106 = vpack.c.b16 %v99, %v98
    %v107 = vpack.c.b16 %v101, %v100
    %v108 = vpack.c.b16 %v103, %v102
    %v109 = vpack.c.b16 %v105, %v104
    %v118 = vunpack.c.l.b16 %v60
    %v119 = vunpack.c.h.b16 %v60
    %v120 = vunpack.c.l.b16 %v61
    %v121 = vunpack.c.h.b16 %v61
    %v122 = vunpack.c.l.b16 %v62
    %v123 = vunpack.c.h.b16 %v62
    %v124 = vunpack.c.l.b16 %v63
    %v125 = vunpack.c.h.b16 %v63
    %v126 = vunpack.c.l.b16 %v64
    %v127 = vunpack.c.h.b16 %v64
    %v128 = vunpack.c.l.b16 %v65
    %v129 = vunpack.c.h.b16 %v65
    %v130 = vunpack.c.l.b16 %v66
    %v131 = vunpack.c.h.b16 %v66
    %v132 = vunpack.c.l.b16 %v67
    %v133 = vunpack.c.h.b16 %v67
    %v134 = vpack.c.b16 %v122, %v118
    %v135 = vpack.c.b16 %v123, %v119
    %v136 = vpack.c.b16 %v124, %v120
    %v137 = vpack.c.b16 %v125, %v121
    %v138 = vpack.c.b16 %v130, %v126
    %v139 = vpack.c.b16 %v131, %v127
    %v140 = vpack.c.b16 %v132, %v128
    %v141 = vpack.c.b16 %v133, %v129
    %vm150 = vcmask 261120
    %v152 = vsel %vm150, %v106, 0
    %v155 = vsel %vm150, %v107, 0
    %v158 = vsel %vm150, %v108, 0
    %v161 = vsel %vm150, %v109, 0
    %163 = vmatprep.subr.bf16.mxu0 0
    %164 = vmatpush1.bf16.msra.mxu0 0
    %165 = vmatprep.subr.bf16.mxu0 0
    %166 = vmatpush1.bf16.msra.mxu0 0
    %167 = vmatprep.subr.bf16.mxu0 0
    %168 = vmatpush1.bf16.msra.mxu0 0
    %169 = vmatprep.subr.bf16.mxu0 0
    %170 = vmatpush1.bf16.msra.mxu0 0
    %171 = vmatprep.subr.bf16.mxu0 0
    %172 = vmatpush1.bf16.msra.mxu0 0
    %173 = vmatprep.subr.bf16.mxu0 0
    %174 = vmatpush1.bf16.msra.mxu0 0
    %175 = vmatprep.subr.bf16.mxu0 %v139
    %176 = vmatpush1.bf16.msra.mxu0 %v138
    %177 = vmatprep.subr.bf16.mxu0 %v135
    %178 = vmatpush1.bf16.msra.mxu0 %v134
    %179 = vmatprep.subr.bf16.mxu0 0
    %180 = vmatpush2.bf16.msra.mxu0 0
    %181 = vmatprep.subr.bf16.mxu0 0
    %182 = vmatpush2.bf16.msra.mxu0 0
    %183 = vmatprep.subr.bf16.mxu0 0
    %184 = vmatpush2.bf16.msra.mxu0 0
    %185 = vmatprep.subr.bf16.mxu0 0
    %186 = vmatpush2.bf16.msra.mxu0 0
    %187 = vmatprep.subr.bf16.mxu0 0
    %188 = vmatpush2.bf16.msra.mxu0 0
    %189 = vmatprep.subr.bf16.mxu0 0
    %190 = vmatpush2.bf16.msra.mxu0 0
    %191 = vmatprep.subr.bf16.mxu0 0
    %192 = vmatpush2.bf16.msra.mxu0 0
    %193 = vmatprep.subr.bf16.mxu0 0
    %194 = vmatpush2.bf16.msra.mxu0 0
    %195 = vmatprep.mubr.bf16.mxu0 0
    %196 = vmatmul.mubr.bf16.gmra.mxu0 %v152
    %v197 = vpop.f32.mrf.mxu0
    %v198 = vadd.f32 %v73, %v197
    %v199 = vpop.f32.mrf.mxu0
    %v200 = vadd.f32 %v77, %v199
    %v201 = vpop.f32.mrf.mxu0
    %v202 = vadd.f32 %v73, %v201
    %v203 = vpop.f32.mrf.mxu0
    %v204 = vadd.f32 %v77, %v203
    %205 = vmatprep.mubr.bf16.mxu0 0
    %206 = vmatmul.mubr.bf16.gmra.mxu0 %v155
    %v207 = vpop.f32.mrf.mxu0
    %v208 = vadd.f32 %v73, %v207
    %v209 = vpop.f32.mrf.mxu0
    %v210 = vadd.f32 %v77, %v209
    %v211 = vpop.f32.mrf.mxu0
    %v212 = vadd.f32 %v73, %v211
    %v213 = vpop.f32.mrf.mxu0
    %v214 = vadd.f32 %v77, %v213
    %215 = vmatprep.mubr.bf16.mxu0 0
    %216 = vmatmul.mubr.bf16.gmra.mxu0 %v158
    %v217 = vpop.f32.mrf.mxu0
    %v218 = vadd.f32 %v73, %v217
    %v219 = vpop.f32.mrf.mxu0
    %v220 = vadd.f32 %v77, %v219
    %v221 = vpop.f32.mrf.mxu0
    %v222 = vadd.f32 %v73, %v221
    %v223 = vpop.f32.mrf.mxu0
    %v224 = vadd.f32 %v77, %v223
    %225 = vmatprep.mubr.bf16.mxu0 0
    %226 = vmatmul.mubr.bf16.gmra.mxu0 %v161
    %v227 = vpop.f32.mrf.mxu0
    %v228 = vadd.f32 %v73, %v227
    %v229 = vpop.f32.mrf.mxu0
    %v230 = vadd.f32 %v77, %v229
    %v231 = vpop.f32.mrf.mxu0
    %v232 = vadd.f32 %v73, %v231
    %v233 = vpop.f32.mrf.mxu0
    %v234 = vadd.f32 %v77, %v233
    %235 = vdwg.mxu0
    %236 = vmatprep.subr.bf16.mxu0 0
    %237 = vmatpush1.bf16.msra.mxu0 0
    %238 = vmatprep.subr.bf16.mxu0 0
    %239 = vmatpush1.bf16.msra.mxu0 0
    %240 = vmatprep.subr.bf16.mxu0 0
    %241 = vmatpush1.bf16.msra.mxu0 0
    %242 = vmatprep.subr.bf16.mxu0 0
    %243 = vmatpush1.bf16.msra.mxu0 0
    %244 = vmatprep.subr.bf16.mxu0 0
    %245 = vmatpush1.bf16.msra.mxu0 0
    %246 = vmatprep.subr.bf16.mxu0 0
    %247 = vmatpush1.bf16.msra.mxu0 0
    %248 = vmatprep.subr.bf16.mxu0 %v141
    %249 = vmatpush1.bf16.msra.mxu0 %v140
    %250 = vmatprep.subr.bf16.mxu0 %v137
    %251 = vmatpush1.bf16.msra.mxu0 %v136
    %252 = vmatprep.subr.bf16.mxu0 0
    %253 = vmatpush2.bf16.msra.mxu0 0
    %254 = vmatprep.subr.bf16.mxu0 0
    %255 = vmatpush2.bf16.msra.mxu0 0
    %256 = vmatprep.subr.bf16.mxu0 0
    %257 = vmatpush2.bf16.msra.mxu0 0
    %258 = vmatprep.subr.bf16.mxu0 0
    %259 = vmatpush2.bf16.msra.mxu0 0
    %260 = vmatprep.subr.bf16.mxu0 0
    %261 = vmatpush2.bf16.msra.mxu0 0
    %262 = vmatprep.subr.bf16.mxu0 0
    %263 = vmatpush2.bf16.msra.mxu0 0
    %264 = vmatprep.subr.bf16.mxu0 0
    %265 = vmatpush2.bf16.msra.mxu0 0
    %266 = vmatprep.subr.bf16.mxu0 0
    %267 = vmatpush2.bf16.msra.mxu0 0
    %268 = vmatprep.mubr.bf16.mxu0 0
    %269 = vmatmul.mubr.bf16.gmra.mxu0 %v152
    %v270 = vpop.f32.mrf.mxu0
    %v271 = vadd.f32 %v81, %v270
    %v272 = vpop.f32.mrf.mxu0
    %v273 = vadd.f32 %v85, %v272
    %v274 = vpop.f32.mrf.mxu0
    %v275 = vadd.f32 %v81, %v274
    %v276 = vpop.f32.mrf.mxu0
    %v277 = vadd.f32 %v85, %v276
    %278 = vmatprep.mubr.bf16.mxu0 0
    %279 = vmatmul.mubr.bf16.gmra.mxu0 %v155
    %v280 = vpop.f32.mrf.mxu0
    %v281 = vadd.f32 %v81, %v280
    %v282 = vpop.f32.mrf.mxu0
    %v283 = vadd.f32 %v85, %v282
    %v284 = vpop.f32.mrf.mxu0
    %v285 = vadd.f32 %v81, %v284
    %v286 = vpop.f32.mrf.mxu0
    %v287 = vadd.f32 %v85, %v286
    %288 = vmatprep.mubr.bf16.mxu0 0
    %289 = vmatmul.mubr.bf16.gmra.mxu0 %v158
    %v290 = vpop.f32.mrf.mxu0
    %v291 = vadd.f32 %v81, %v290
    %v292 = vpop.f32.mrf.mxu0
    %v293 = vadd.f32 %v85, %v292
    %v294 = vpop.f32.mrf.mxu0
    %v295 = vadd.f32 %v81, %v294
    %v296 = vpop.f32.mrf.mxu0
    %v297 = vadd.f32 %v85, %v296
    %298 = vmatprep.mubr.bf16.mxu0 0
    %299 = vmatmul.mubr.bf16.gmra.mxu0 %v161
    %v300 = vpop.f32.mrf.mxu0
    %v301 = vadd.f32 %v81, %v300
    %v302 = vpop.f32.mrf.mxu0
    %v303 = vadd.f32 %v85, %v302
    %v304 = vpop.f32.mrf.mxu0
    %v305 = vadd.f32 %v81, %v304
    %v306 = vpop.f32.mrf.mxu0
    %v307 = vadd.f32 %v85, %v306
    %308 = vdwg.mxu0
    %309 = vst [vmem:[#allocation2] sm:$0xff] %v198
    %310 = vst [vmem:[#allocation2 + $0x8] sm:$0xff] %v200
    %311 = vst [vmem:[#allocation2 + $0x10] sm:$0xff] %v271
    %312 = vst [vmem:[#allocation2 + $0x18] sm:$0xff] %v273
    %313 = vst [vmem:[#allocation2 + $0x20] sm:$0xff] %v202
    %314 = vst [vmem:[#allocation2 + $0x28] sm:$0xff] %v204
    %315 = vst [vmem:[#allocation2 + $0x30] sm:$0xff] %v275
    %316 = vst [vmem:[#allocation2 + $0x38] sm:$0xff] %v277
    %317 = vst [vmem:[#allocation2 + $0x40] sm:$0xff] %v208
    %318 = vst [vmem:[#allocation2 + $0x48] sm:$0xff] %v210
    %319 = vst [vmem:[#allocation2 + $0x50] sm:$0xff] %v281
    %320 = vst [vmem:[#allocation2 + $0x58] sm:$0xff] %v283
    %321 = vst [vmem:[#allocation2 + $0x60] sm:$0xff] %v212
    %322 = vst [vmem:[#allocation2 + $0x68] sm:$0xff] %v214
    %323 = vst [vmem:[#allocation2 + $0x70] sm:$0xff] %v285
    %324 = vst [vmem:[#allocation2 + $0x78] sm:$0xff] %v287
    %325 = vst [vmem:[#allocation2 + $0x80] sm:$0xff] %v218
    %326 = vst [vmem:[#allocation2 + $0x88] sm:$0xff] %v220
    %327 = vst [vmem:[#allocation2 + $0x90] sm:$0xff] %v291
    %328 = vst [vmem:[#allocation2 + $0x98] sm:$0xff] %v293
    %329 = vst [vmem:[#allocation2 + $0xa0] sm:$0xff] %v222
    %330 = vst [vmem:[#allocation2 + $0xa8] sm:$0xff] %v224
    %331 = vst [vmem:[#allocation2 + $0xb0] sm:$0xff] %v295
    %332 = vst [vmem:[#allocation2 + $0xb8] sm:$0xff] %v297
    %333 = vst [vmem:[#allocation2 + $0xc0] sm:$0xff] %v228
    %334 = vst [vmem:[#allocation2 + $0xc8] sm:$0xff] %v230
    %335 = vst [vmem:[#allocation2 + $0xd0] sm:$0xff] %v301
    %336 = vst [vmem:[#allocation2 + $0xd8] sm:$0xff] %v303
    %337 = vst [vmem:[#allocation2 + $0xe0] sm:$0xff] %v232
    %338 = vst [vmem:[#allocation2 + $0xe8] sm:$0xff] %v234
    %339 = vst [vmem:[#allocation2 + $0xf0] sm:$0xff] %v305
    %340 = vst [vmem:[#allocation2 + $0xf8] sm:$0xff] %v307
    %v341 = vld [vmem:[#allocation2] sm:$0xff]
    %v342 = vld [vmem:[#allocation2 + $0x8] sm:$0xff]
    %v343 = vld [vmem:[#allocation2 + $0x10] sm:$0xff]
    %v344 = vld [vmem:[#allocation2 + $0x18] sm:$0xff]
    %v345 = vld [vmem:[#allocation5] sm:$0xff]
    %v346 = vld [vmem:[#allocation5 + $0x8] sm:$0xff]
    %v347 = vld [vmem:[#allocation5 + $0x10] sm:$0xff]
    %v348 = vld [vmem:[#allocation5 + $0x18] sm:$0xff]
    %v349 = vld [vmem:[#allocation5 + $0x20] sm:$0xff]
    %v350 = vld [vmem:[#allocation5 + $0x28] sm:$0xff]
    %v351 = vld [vmem:[#allocation5 + $0x30] sm:$0xff]
    %v352 = vld [vmem:[#allocation5 + $0x38] sm:$0xff]
    %v353 = vld [vmem:[#allocation5 + $0x40] sm:$0xff]
    %v354 = vld [vmem:[#allocation5 + $0x48] sm:$0xff]
    %v355 = vld [vmem:[#allocation5 + $0x50] sm:$0xff]
    %v356 = vld [vmem:[#allocation5 + $0x58] sm:$0xff]
    %v357 = vld [vmem:[#allocation5 + $0x60] sm:$0xff]
    %v358 = vld [vmem:[#allocation5 + $0x68] sm:$0xff]
    %v359 = vld [vmem:[#allocation5 + $0x70] sm:$0xff]
    %v360 = vld [vmem:[#allocation5 + $0x78] sm:$0xff]
    %v361 = vld [vmem:[#allocation5 + $0x80] sm:$0xff]
    %v362 = vld [vmem:[#allocation5 + $0x88] sm:$0xff]
    %v363 = vld [vmem:[#allocation5 + $0x90] sm:$0xff]
    %v364 = vld [vmem:[#allocation5 + $0x98] sm:$0xff]
    %v365 = vld [vmem:[#allocation5 + $0xa0] sm:$0xff]
    %v366 = vld [vmem:[#allocation5 + $0xa8] sm:$0xff]
    %v367 = vld [vmem:[#allocation5 + $0xb0] sm:$0xff]
    %v368 = vld [vmem:[#allocation5 + $0xb8] sm:$0xff]
    %v369 = vld [vmem:[#allocation5 + $0xc0] sm:$0xff]
    %v370 = vld [vmem:[#allocation5 + $0xc8] sm:$0xff]
    %v371 = vld [vmem:[#allocation5 + $0xd0] sm:$0xff]
    %v372 = vld [vmem:[#allocation5 + $0xd8] sm:$0xff]
    %v373 = vld [vmem:[#allocation5 + $0xe0] sm:$0xff]
    %v374 = vld [vmem:[#allocation5 + $0xe8] sm:$0xff]
    %v375 = vld [vmem:[#allocation5 + $0xf0] sm:$0xff]
    %v376 = vld [vmem:[#allocation5 + $0xf8] sm:$0xff]
    %v409 = vunpack.c.l.b16 %v345
    %v410 = vunpack.c.h.b16 %v345
    %v411 = vunpack.c.l.b16 %v346
    %v412 = vunpack.c.h.b16 %v346
    %v413 = vunpack.c.l.b16 %v347
    %v414 = vunpack.c.h.b16 %v347
    %v415 = vunpack.c.l.b16 %v348
    %v416 = vunpack.c.h.b16 %v348
    %v417 = vunpack.c.l.b16 %v349
    %v418 = vunpack.c.h.b16 %v349
    %v419 = vunpack.c.l.b16 %v350
    %v420 = vunpack.c.h.b16 %v350
    %v421 = vunpack.c.l.b16 %v351
    %v422 = vunpack.c.h.b16 %v351
    %v423 = vunpack.c.l.b16 %v352
    %v424 = vunpack.c.h.b16 %v352
    %v425 = vunpack.c.l.b16 %v353
    %v426 = vunpack.c.h.b16 %v353
    %v427 = vunpack.c.l.b16 %v354
    %v428 = vunpack.c.h.b16 %v354
    %v429 = vunpack.c.l.b16 %v355
    %v430 = vunpack.c.h.b16 %v355
    %v431 = vunpack.c.l.b16 %v356
    %v432 = vunpack.c.h.b16 %v356
    %v433 = vunpack.c.l.b16 %v357
    %v434 = vunpack.c.h.b16 %v357
    %v435 = vunpack.c.l.b16 %v358
    %v436 = vunpack.c.h.b16 %v358
    %v437 = vunpack.c.l.b16 %v359
    %v438 = vunpack.c.h.b16 %v359
    %v439 = vunpack.c.l.b16 %v360
    %v440 = vunpack.c.h.b16 %v360
    %v441 = vunpack.c.l.b16 %v361
    %v442 = vunpack.c.h.b16 %v361
    %v443 = vunpack.c.l.b16 %v362
    %v444 = vunpack.c.h.b16 %v362
    %v445 = vunpack.c.l.b16 %v363
    %v446 = vunpack.c.h.b16 %v363
    %v447 = vunpack.c.l.b16 %v364
    %v448 = vunpack.c.h.b16 %v364
    %v449 = vunpack.c.l.b16 %v365
    %v450 = vunpack.c.h.b16 %v365
    %v451 = vunpack.c.l.b16 %v366
    %v452 = vunpack.c.h.b16 %v366
    %v453 = vunpack.c.l.b16 %v367
    %v454 = vunpack.c.h.b16 %v367
    %v455 = vunpack.c.l.b16 %v368
    %v456 = vunpack.c.h.b16 %v368
    %v457 = vunpack.c.l.b16 %v369
    %v458 = vunpack.c.h.b16 %v369
    %v459 = vunpack.c.l.b16 %v370
    %v460 = vunpack.c.h.b16 %v370
    %v461 = vunpack.c.l.b16 %v371
    %v462 = vunpack.c.h.b16 %v371
    %v463 = vunpack.c.l.b16 %v372
    %v464 = vunpack.c.h.b16 %v372
    %v465 = vunpack.c.l.b16 %v373
    %v466 = vunpack.c.h.b16 %v373
    %v467 = vunpack.c.l.b16 %v374
    %v468 = vunpack.c.h.b16 %v374
    %v469 = vunpack.c.l.b16 %v375
    %v470 = vunpack.c.h.b16 %v375
    %v471 = vunpack.c.l.b16 %v376
    %v472 = vunpack.c.h.b16 %v376
    %v473 = vpack.c.b16 %v413, %v409
    %v474 = vpack.c.b16 %v414, %v410
    %v475 = vpack.c.b16 %v415, %v411
    %v476 = vpack.c.b16 %v416, %v412
    %v477 = vpack.c.b16 %v421, %v417
    %v478 = vpack.c.b16 %v422, %v418
    %v479 = vpack.c.b16 %v423, %v419
    %v480 = vpack.c.b16 %v424, %v420
    %v481 = vpack.c.b16 %v429, %v425
    %v482 = vpack.c.b16 %v430, %v426
    %v483 = vpack.c.b16 %v431, %v427
    %v484 = vpack.c.b16 %v432, %v428
    %v485 = vpack.c.b16 %v437, %v433
    %v486 = vpack.c.b16 %v438, %v434
    %v487 = vpack.c.b16 %v439, %v435
    %v488 = vpack.c.b16 %v440, %v436
    %v489 = vpack.c.b16 %v445, %v441
    %v490 = vpack.c.b16 %v446, %v442
    %v491 = vpack.c.b16 %v447, %v443
    %v492 = vpack.c.b16 %v448, %v444
    %v493 = vpack.c.b16 %v453, %v449
    %v494 = vpack.c.b16 %v454, %v450
    %v495 = vpack.c.b16 %v455, %v451
    %v496 = vpack.c.b16 %v456, %v452
    %v497 = vpack.c.b16 %v461, %v457
    %v498 = vpack.c.b16 %v462, %v458
    %v499 = vpack.c.b16 %v463, %v459
    %v500 = vpack.c.b16 %v464, %v460
    %v501 = vpack.c.b16 %v469, %v465
    %v502 = vpack.c.b16 %v470, %v466
    %v503 = vpack.c.b16 %v471, %v467
    %v504 = vpack.c.b16 %v472, %v468
    %537 = vmatprep.subr.bf16.mxu0 %v502
    %538 = vmatpush1.bf16.msra.mxu0 %v501
    %539 = vmatprep.subr.bf16.mxu0 %v498
    %540 = vmatpush1.bf16.msra.mxu0 %v497
    %541 = vmatprep.subr.bf16.mxu0 %v494
    %542 = vmatpush1.bf16.msra.mxu0 %v493
    %543 = vmatprep.subr.bf16.mxu0 %v490
    %544 = vmatpush1.bf16.msra.mxu0 %v489
    %545 = vmatprep.subr.bf16.mxu0 %v486
    %546 = vmatpush1.bf16.msra.mxu0 %v485
    %547 = vmatprep.subr.bf16.mxu0 %v482
    %548 = vmatpush1.bf16.msra.mxu0 %v481
    %549 = vmatprep.subr.bf16.mxu0 %v478
    %550 = vmatpush1.bf16.msra.mxu0 %v477
    %551 = vmatprep.subr.bf16.mxu0 %v474
    %552 = vmatpush1.bf16.msra.mxu0 %v473
    %553 = vmatprep.subr.bf16.mxu0 0
    %554 = vmatpush2.bf16.msra.mxu0 0
    %555 = vmatprep.subr.bf16.mxu0 0
    %556 = vmatpush2.bf16.msra.mxu0 0
    %557 = vmatprep.subr.bf16.mxu0 0
    %558 = vmatpush2.bf16.msra.mxu0 0
    %559 = vmatprep.subr.bf16.mxu0 0
    %560 = vmatpush2.bf16.msra.mxu0 0
    %561 = vmatprep.subr.bf16.mxu0 0
    %562 = vmatpush2.bf16.msra.mxu0 0
    %563 = vmatprep.subr.bf16.mxu0 0
    %564 = vmatpush2.bf16.msra.mxu0 0
    %565 = vmatprep.subr.bf16.mxu0 0
    %566 = vmatpush2.bf16.msra.mxu0 0
    %567 = vmatprep.subr.bf16.mxu0 0
    %568 = vmatpush2.bf16.msra.mxu0 0
    %569 = vmatprep.mubr.bf16.mxu0 0
    %570 = vmatmul.mubr.bf16.gmra.mxu0 0
    %v571 = vpop.f32.mrf.mxu0
    %v572 = vadd.f32 0.0, %v571
    %v573 = vpop.f32.mrf.mxu0
    %v574 = vadd.f32 0.0, %v573
    %v575 = vpop.f32.mrf.mxu0
    %v576 = vpop.f32.mrf.mxu0
    %577 = vdwg.mxu0
    %578 = vmatprep.subr.bf16.mxu0 %v504
    %579 = vmatpush1.bf16.msra.mxu0 %v503
    %580 = vmatprep.subr.bf16.mxu0 %v500
    %581 = vmatpush1.bf16.msra.mxu0 %v499
    %582 = vmatprep.subr.bf16.mxu0 %v496
    %583 = vmatpush1.bf16.msra.mxu0 %v495
    %584 = vmatprep.subr.bf16.mxu0 %v492
    %585 = vmatpush1.bf16.msra.mxu0 %v491
    %586 = vmatprep.subr.bf16.mxu0 %v488
    %587 = vmatpush1.bf16.msra.mxu0 %v487
    %588 = vmatprep.subr.bf16.mxu0 %v484
    %589 = vmatpush1.bf16.msra.mxu0 %v483
    %590 = vmatprep.subr.bf16.mxu0 %v480
    %591 = vmatpush1.bf16.msra.mxu0 %v479
    %592 = vmatprep.subr.bf16.mxu0 %v476
    %593 = vmatpush1.bf16.msra.mxu0 %v475
    %594 = vmatprep.subr.bf16.mxu0 0
    %595 = vmatpush2.bf16.msra.mxu0 0
    %596 = vmatprep.subr.bf16.mxu0 0
    %597 = vmatpush2.bf16.msra.mxu0 0
    %598 = vmatprep.subr.bf16.mxu0 0
    %599 = vmatpush2.bf16.msra.mxu0 0
    %600 = vmatprep.subr.bf16.mxu0 0
    %601 = vmatpush2.bf16.msra.mxu0 0
    %602 = vmatprep.subr.bf16.mxu0 0
    %603 = vmatpush2.bf16.msra.mxu0 0
    %604 = vmatprep.subr.bf16.mxu0 0
    %605 = vmatpush2.bf16.msra.mxu0 0
    %606 = vmatprep.subr.bf16.mxu0 0
    %607 = vmatpush2.bf16.msra.mxu0 0
    %608 = vmatprep.subr.bf16.mxu0 0
    %609 = vmatpush2.bf16.msra.mxu0 0
    %610 = vmatprep.mubr.bf16.mxu0 0
    %611 = vmatmul.mubr.bf16.gmra.mxu0 0
    %v612 = vpop.f32.mrf.mxu0
    %v613 = vadd.f32 0.0, %v612
    %v614 = vpop.f32.mrf.mxu0
    %v615 = vadd.f32 0.0, %v614
    %v616 = vpop.f32.mrf.mxu0
    %v617 = vpop.f32.mrf.mxu0
    %618 = vdwg.mxu0
    %v619 = vadd.f32 %v341, %v572
    %v620 = vadd.f32 %v342, %v574
    %v621 = vadd.f32 %v343, %v613
    %v622 = vadd.f32 %v344, %v615
    %v623 = vmul.f32 %v619, 0.5
    %v624 = vtanh.pop %v623
    %v625 = vmul.f32 %v624, 0.5
    %v626 = vadd.f32 %v625, 0.5
    %v627 = vmul.f32 %v620, 0.5
    %v628 = vtanh.pop %v627
    %v629 = vmul.f32 %v628, 0.5
    %v630 = vadd.f32 %v629, 0.5
    %v631 = vtanh.pop %v621
    %v632 = vmul.f32 %v622, 0.5
    %v633 = vtanh.pop %v632
    %v634 = vmul.f32 %v633, 0.5
    %v635 = vadd.f32 %v634, 0.5
    %v636 = vmul.f32 %v630, 0.0
    %v637 = vmul.f32 %v626, %v631
    %v638 = vadd.f32 %v636, %v637
    %v639 = vtanh.pop %v638
    %v640 = vmul.f32 %v635, %v639
    %v641 = vld [vmem:[#allocation2 + $0x20] sm:$0xff]
    %v642 = vld [vmem:[#allocation2 + $0x28] sm:$0xff]
    %v643 = vld [vmem:[#allocation2 + $0x30] sm:$0xff]
    %v644 = vld [vmem:[#allocation2 + $0x38] sm:$0xff]
    %v645 = vpack.c.bf16 %v640, %v640
    %646 = vmatprep.subr.bf16.mxu0 %v502
    %647 = vmatpush1.bf16.msra.mxu0 %v501
    %648 = vmatprep.subr.bf16.mxu0 %v498
    %649 = vmatpush1.bf16.msra.mxu0 %v497
    %650 = vmatprep.subr.bf16.mxu0 %v494
    %651 = vmatpush1.bf16.msra.mxu0 %v493
    %652 = vmatprep.subr.bf16.mxu0 %v490
    %653 = vmatpush1.bf16.msra.mxu0 %v489
    %654 = vmatprep.subr.bf16.mxu0 %v486
    %655 = vmatpush1.bf16.msra.mxu0 %v485
    %656 = vmatprep.subr.bf16.mxu0 %v482
    %657 = vmatpush1.bf16.msra.mxu0 %v481
    %658 = vmatprep.subr.bf16.mxu0 %v478
    %659 = vmatpush1.bf16.msra.mxu0 %v477
    %660 = vmatprep.subr.bf16.mxu0 %v474
    %661 = vmatpush1.bf16.msra.mxu0 %v473
    %662 = vmatprep.subr.bf16.mxu0 0
    %663 = vmatpush2.bf16.msra.mxu0 0
    %664 = vmatprep.subr.bf16.mxu0 0
    %665 = vmatpush2.bf16.msra.mxu0 0
    %666 = vmatprep.subr.bf16.mxu0 0
    %667 = vmatpush2.bf16.msra.mxu0 0
    %668 = vmatprep.subr.bf16.mxu0 0
    %669 = vmatpush2.bf16.msra.mxu0 0
    %670 = vmatprep.subr.bf16.mxu0 0
    %671 = vmatpush2.bf16.msra.mxu0 0
    %672 = vmatprep.subr.bf16.mxu0 0
    %673 = vmatpush2.bf16.msra.mxu0 0
    %674 = vmatprep.subr.bf16.mxu0 0
    %675 = vmatpush2.bf16.msra.mxu0 0
    %676 = vmatprep.subr.bf16.mxu0 0
    %677 = vmatpush2.bf16.msra.mxu0 0
    %678 = vmatprep.mubr.bf16.mxu0 0
    %679 = vmatmul.mubr.bf16.gmra.mxu0 %v645
    %v680 = vpop.f32.mrf.mxu0
    %v681 = vadd.f32 0.0, %v680
    %v682 = vpop.f32.mrf.mxu0
    %v683 = vadd.f32 0.0, %v682
    %v684 = vpop.f32.mrf.mxu0
    %v685 = vpop.f32.mrf.mxu0
    %686 = vdwg.mxu0
    %687 = vmatprep.subr.bf16.mxu0 %v504
    %688 = vmatpush1.bf16.msra.mxu0 %v503
    %689 = vmatprep.subr.bf16.mxu0 %v500
    %690 = vmatpush1.bf16.msra.mxu0 %v499
    %691 = vmatprep.subr.bf16.mxu0 %v496
    %692 = vmatpush1.bf16.msra.mxu0 %v495
    %693 = vmatprep.subr.bf16.mxu0 %v492
    %694 = vmatpush1.bf16.msra.mxu0 %v491
    %695 = vmatprep.subr.bf16.mxu0 %v488
    %696 = vmatpush1.bf16.msra.mxu0 %v487
    %697 = vmatprep.subr.bf16.mxu0 %v484
    %698 = vmatpush1.bf16.msra.mxu0 %v483
    %699 = vmatprep.subr.bf16.mxu0 %v480
    %700 = vmatpush1.bf16.msra.mxu0 %v479
    %701 = vmatprep.subr.bf16.mxu0 %v476
    %702 = vmatpush1.bf16.msra.mxu0 %v475
    %703 = vmatprep.subr.bf16.mxu0 0
    %704 = vmatpush2.bf16.msra.mxu0 0
    %705 = vmatprep.subr.bf16.mxu0 0
    %706 = vmatpush2.bf16.msra.mxu0 0
    %707 = vmatprep.subr.bf16.mxu0 0
    %708 = vmatpush2.bf16.msra.mxu0 0
    %709 = vmatprep.subr.bf16.mxu0 0
    %710 = vmatpush2.bf16.msra.mxu0 0
    %711 = vmatprep.subr.bf16.mxu0 0
    %712 = vmatpush2.bf16.msra.mxu0 0
    %713 = vmatprep.subr.bf16.mxu0 0
    %714 = vmatpush2.bf16.msra.mxu0 0
    %715 = vmatprep.subr.bf16.mxu0 0
    %716 = vmatpush2.bf16.msra.mxu0 0
    %717 = vmatprep.subr.bf16.mxu0 0
    %718 = vmatpush2.bf16.msra.mxu0 0
    %719 = vmatprep.mubr.bf16.mxu0 0
    %720 = vmatmul.mubr.bf16.gmra.mxu0 %v645
    %v721 = vpop.f32.mrf.mxu0
    %v722 = vadd.f32 0.0, %v721
    %v723 = vpop.f32.mrf.mxu0
    %v724 = vadd.f32 0.0, %v723
    %v725 = vpop.f32.mrf.mxu0
    %v726 = vpop.f32.mrf.mxu0
    %727 = vdwg.mxu0
    %v728 = vadd.f32 %v641, %v681
    %v729 = vadd.f32 %v642, %v683
    %v730 = vadd.f32 %v643, %v722
    %v731 = vadd.f32 %v644, %v724
    %v732 = vmul.f32 %v728, 0.5
    %v733 = vtanh.pop %v732
    %v734 = vmul.f32 %v733, 0.5
    %v735 = vadd.f32 %v734, 0.5
    %v736 = vmul.f32 %v729, 0.5
    %v737 = vtanh.pop %v736
    %v738 = vmul.f32 %v737, 0.5
    %v739 = vadd.f32 %v738, 0.5
    %v740 = vtanh.pop %v730
    %v741 = vmul.f32 %v731, 0.5
    %v742 = vtanh.pop %v741
    %v743 = vmul.f32 %v742, 0.5
    %v744 = vadd.f32 %v743, 0.5
    %v745 = vmul.f32 %v739, %v638
    %v746 = vmul.f32 %v735, %v740
    %v747 = vadd.f32 %v745, %v746
    %v748 = vtanh.pop %v747
    %v749 = vmul.f32 %v744, %v748
    %v750 = vld [vmem:[#allocation2 + $0x40] sm:$0xff]
    %v751 = vld [vmem:[#allocation2 + $0x48] sm:$0xff]
    %v752 = vld [vmem:[#allocation2 + $0x50] sm:$0xff]
    %v753 = vld [vmem:[#allocation2 + $0x58] sm:$0xff]
    %v754 = vpack.c.bf16 %v749, %v749
    %755 = vmatprep.subr.bf16.mxu0 %v502
    %756 = vmatpush1.bf16.msra.mxu0 %v501
    %757 = vmatprep.subr.bf16.mxu0 %v498
    %758 = vmatpush1.bf16.msra.mxu0 %v497
    %759 = vmatprep.subr.bf16.mxu0 %v494
    %760 = vmatpush1.bf16.msra.mxu0 %v493
    %761 = vmatprep.subr.bf16.mxu0 %v490
    %762 = vmatpush1.bf16.msra.mxu0 %v489
    %763 = vmatprep.subr.bf16.mxu0 %v486
    %764 = vmatpush1.bf16.msra.mxu0 %v485
    %765 = vmatprep.subr.bf16.mxu0 %v482
    %766 = vmatpush1.bf16.msra.mxu0 %v481
    %767 = vmatprep.subr.bf16.mxu0 %v478
    %768 = vmatpush1.bf16.msra.mxu0 %v477
    %769 = vmatprep.subr.bf16.mxu0 %v474
    %770 = vmatpush1.bf16.msra.mxu0 %v473
    %771 = vmatprep.subr.bf16.mxu0 0
    %772 = vmatpush2.bf16.msra.mxu0 0
    %773 = vmatprep.subr.bf16.mxu0 0
    %774 = vmatpush2.bf16.msra.mxu0 0
    %775 = vmatprep.subr.bf16.mxu0 0
    %776 = vmatpush2.bf16.msra.mxu0 0
    %777 = vmatprep.subr.bf16.mxu0 0
    %778 = vmatpush2.bf16.msra.mxu0 0
    %779 = vmatprep.subr.bf16.mxu0 0
    %780 = vmatpush2.bf16.msra.mxu0 0
    %781 = vmatprep.subr.bf16.mxu0 0
    %782 = vmatpush2.bf16.msra.mxu0 0
    %783 = vmatprep.subr.bf16.mxu0 0
    %784 = vmatpush2.bf16.msra.mxu0 0
    %785 = vmatprep.subr.bf16.mxu0 0
    %786 = vmatpush2.bf16.msra.mxu0 0
    %787 = vmatprep.mubr.bf16.mxu0 0
    %788 = vmatmul.mubr.bf16.gmra.mxu0 %v754
    %v789 = vpop.f32.mrf.mxu0
    %v790 = vadd.f32 0.0, %v789
    %v791 = vpop.f32.mrf.mxu0
    %v792 = vadd.f32 0.0, %v791
    %v793 = vpop.f32.mrf.mxu0
    %v794 = vpop.f32.mrf.mxu0
    %795 = vdwg.mxu0
    %796 = vmatprep.subr.bf16.mxu0 %v504
    %797 = vmatpush1.bf16.msra.mxu0 %v503
    %798 = vmatprep.subr.bf16.mxu0 %v500
    %799 = vmatpush1.bf16.msra.mxu0 %v499
    %800 = vmatprep.subr.bf16.mxu0 %v496
    %801 = vmatpush1.bf16.msra.mxu0 %v495
    %802 = vmatprep.subr.bf16.mxu0 %v492
    %803 = vmatpush1.bf16.msra.mxu0 %v491
    %804 = vmatprep.subr.bf16.mxu0 %v488
    %805 = vmatpush1.bf16.msra.mxu0 %v487
    %806 = vmatprep.subr.bf16.mxu0 %v484
    %807 = vmatpush1.bf16.msra.mxu0 %v483
    %808 = vmatprep.subr.bf16.mxu0 %v480
    %809 = vmatpush1.bf16.msra.mxu0 %v479
    %810 = vmatprep.subr.bf16.mxu0 %v476
    %811 = vmatpush1.bf16.msra.mxu0 %v475
    %812 = vmatprep.subr.bf16.mxu0 0
    %813 = vmatpush2.bf16.msra.mxu0 0
    %814 = vmatprep.subr.bf16.mxu0 0
    %815 = vmatpush2.bf16.msra.mxu0 0
    %816 = vmatprep.subr.bf16.mxu0 0
    %817 = vmatpush2.bf16.msra.mxu0 0
    %818 = vmatprep.subr.bf16.mxu0 0
    %819 = vmatpush2.bf16.msra.mxu0 0
    %820 = vmatprep.subr.bf16.mxu0 0
    %821 = vmatpush2.bf16.msra.mxu0 0
    %822 = vmatprep.subr.bf16.mxu0 0
    %823 = vmatpush2.bf16.msra.mxu0 0
    %824 = vmatprep.subr.bf16.mxu0 0
    %825 = vmatpush2.bf16.msra.mxu0 0
    %826 = vmatprep.subr.bf16.mxu0 0
    %827 = vmatpush2.bf16.msra.mxu0 0
    %828 = vmatprep.mubr.bf16.mxu0 0
    %829 = vmatmul.mubr.bf16.gmra.mxu0 %v754
    %v830 = vpop.f32.mrf.mxu0
    %v831 = vadd.f32 0.0, %v830
    %v832 = vpop.f32.mrf.mxu0
    %v833 = vadd.f32 0.0, %v832
    %v834 = vpop.f32.mrf.mxu0
    %v835 = vpop.f32.mrf.mxu0
    %836 = vdwg.mxu0
    %v837 = vadd.f32 %v750, %v790
    %v838 = vadd.f32 %v751, %v792
    %v839 = vadd.f32 %v752, %v831
    %v840 = vadd.f32 %v753, %v833
    %v841 = vmul.f32 %v837, 0.5
    %v842 = vtanh.pop %v841
    %v843 = vmul.f32 %v842, 0.5
    %v844 = vadd.f32 %v843, 0.5
    %v845 = vmul.f32 %v838, 0.5
    %v846 = vtanh.pop %v845
    %v847 = vmul.f32 %v846, 0.5
    %v848 = vadd.f32 %v847, 0.5
    %v849 = vtanh.pop %v839
    %v850 = vmul.f32 %v840, 0.5
    %v851 = vtanh.pop %v850
    %v852 = vmul.f32 %v851, 0.5
    %v853 = vadd.f32 %v852, 0.5
    %v854 = vmul.f32 %v848, %v747
    %v855 = vmul.f32 %v844, %v849
    %v856 = vadd.f32 %v854, %v855
    %v857 = vtanh.pop %v856
    %v858 = vmul.f32 %v853, %v857
    %v859 = vld [vmem:[#allocation2 + $0x60] sm:$0xff]
    %v860 = vld [vmem:[#allocation2 + $0x68] sm:$0xff]
    %v861 = vld [vmem:[#allocation2 + $0x70] sm:$0xff]
    %v862 = vld [vmem:[#allocation2 + $0x78] sm:$0xff]
    %v863 = vpack.c.bf16 %v858, %v858
    %864 = vmatprep.subr.bf16.mxu0 %v502
    %865 = vmatpush1.bf16.msra.mxu0 %v501
    %866 = vmatprep.subr.bf16.mxu0 %v498
    %867 = vmatpush1.bf16.msra.mxu0 %v497
    %868 = vmatprep.subr.bf16.mxu0 %v494
    %869 = vmatpush1.bf16.msra.mxu0 %v493
    %870 = vmatprep.subr.bf16.mxu0 %v490
    %871 = vmatpush1.bf16.msra.mxu0 %v489
    %872 = vmatprep.subr.bf16.mxu0 %v486
    %873 = vmatpush1.bf16.msra.mxu0 %v485
    %874 = vmatprep.subr.bf16.mxu0 %v482
    %875 = vmatpush1.bf16.msra.mxu0 %v481
    %876 = vmatprep.subr.bf16.mxu0 %v478
    %877 = vmatpush1.bf16.msra.mxu0 %v477
    %878 = vmatprep.subr.bf16.mxu0 %v474
    %879 = vmatpush1.bf16.msra.mxu0 %v473
    %880 = vmatprep.subr.bf16.mxu0 0
    %881 = vmatpush2.bf16.msra.mxu0 0
    %882 = vmatprep.subr.bf16.mxu0 0
    %883 = vmatpush2.bf16.msra.mxu0 0
    %884 = vmatprep.subr.bf16.mxu0 0
    %885 = vmatpush2.bf16.msra.mxu0 0
    %886 = vmatprep.subr.bf16.mxu0 0
    %887 = vmatpush2.bf16.msra.mxu0 0
    %888 = vmatprep.subr.bf16.mxu0 0
    %889 = vmatpush2.bf16.msra.mxu0 0
    %890 = vmatprep.subr.bf16.mxu0 0
    %891 = vmatpush2.bf16.msra.mxu0 0
    %892 = vmatprep.subr.bf16.mxu0 0
    %893 = vmatpush2.bf16.msra.mxu0 0
    %894 = vmatprep.subr.bf16.mxu0 0
    %895 = vmatpush2.bf16.msra.mxu0 0
    %896 = vmatprep.mubr.bf16.mxu0 0
    %897 = vmatmul.mubr.bf16.gmra.mxu0 %v863
    %v898 = vpop.f32.mrf.mxu0
    %v899 = vadd.f32 0.0, %v898
    %v900 = vpop.f32.mrf.mxu0
    %v901 = vadd.f32 0.0, %v900
    %v902 = vpop.f32.mrf.mxu0
    %v903 = vpop.f32.mrf.mxu0
    %904 = vdwg.mxu0
    %905 = vmatprep.subr.bf16.mxu0 %v504
    %906 = vmatpush1.bf16.msra.mxu0 %v503
    %907 = vmatprep.subr.bf16.mxu0 %v500
    %908 = vmatpush1.bf16.msra.mxu0 %v499
    %909 = vmatprep.subr.bf16.mxu0 %v496
    %910 = vmatpush1.bf16.msra.mxu0 %v495
    %911 = vmatprep.subr.bf16.mxu0 %v492
    %912 = vmatpush1.bf16.msra.mxu0 %v491
    %913 = vmatprep.subr.bf16.mxu0 %v488
    %914 = vmatpush1.bf16.msra.mxu0 %v487
    %915 = vmatprep.subr.bf16.mxu0 %v484
    %916 = vmatpush1.bf16.msra.mxu0 %v483
    %917 = vmatprep.subr.bf16.mxu0 %v480
    %918 = vmatpush1.bf16.msra.mxu0 %v479
    %919 = vmatprep.subr.bf16.mxu0 %v476
    %920 = vmatpush1.bf16.msra.mxu0 %v475
    %921 = vmatprep.subr.bf16.mxu0 0
    %922 = vmatpush2.bf16.msra.mxu0 0
    %923 = vmatprep.subr.bf16.mxu0 0
    %924 = vmatpush2.bf16.msra.mxu0 0
    %925 = vmatprep.subr.bf16.mxu0 0
    %926 = vmatpush2.bf16.msra.mxu0 0
    %927 = vmatprep.subr.bf16.mxu0 0
    %928 = vmatpush2.bf16.msra.mxu0 0
    %929 = vmatprep.subr.bf16.mxu0 0
    %930 = vmatpush2.bf16.msra.mxu0 0
    %931 = vmatprep.subr.bf16.mxu0 0
    %932 = vmatpush2.bf16.msra.mxu0 0
    %933 = vmatprep.subr.bf16.mxu0 0
    %934 = vmatpush2.bf16.msra.mxu0 0
    %935 = vmatprep.subr.bf16.mxu0 0
    %936 = vmatpush2.bf16.msra.mxu0 0
    %937 = vmatprep.mubr.bf16.mxu0 0
    %938 = vmatmul.mubr.bf16.gmra.mxu0 %v863
    %v939 = vpop.f32.mrf.mxu0
    %v940 = vadd.f32 0.0, %v939
    %v941 = vpop.f32.mrf.mxu0
    %v942 = vadd.f32 0.0, %v941
    %v943 = vpop.f32.mrf.mxu0
    %v944 = vpop.f32.mrf.mxu0
    %945 = vdwg.mxu0
    %v946 = vadd.f32 %v859, %v899
    %v947 = vadd.f32 %v860, %v901
    %v948 = vadd.f32 %v861, %v940
    %v949 = vadd.f32 %v862, %v942
    %v950 = vmul.f32 %v946, 0.5
    %v951 = vtanh.pop %v950
    %v952 = vmul.f32 %v951, 0.5
    %v953 = vadd.f32 %v952, 0.5
    %v954 = vmul.f32 %v947, 0.5
    %v955 = vtanh.pop %v954
    %v956 = vmul.f32 %v955, 0.5
    %v957 = vadd.f32 %v956, 0.5
    %v958 = vtanh.pop %v948
    %v959 = vmul.f32 %v949, 0.5
    %v960 = vtanh.pop %v959
    %v961 = vmul.f32 %v960, 0.5
    %v962 = vadd.f32 %v961, 0.5
    %v963 = vmul.f32 %v957, %v856
    %v964 = vmul.f32 %v953, %v958
    %v965 = vadd.f32 %v963, %v964
    %v966 = vtanh.pop %v965
    %v967 = vmul.f32 %v962, %v966
    %v968 = vld [vmem:[#allocation2 + $0x80] sm:$0xff]
    %v969 = vld [vmem:[#allocation2 + $0x88] sm:$0xff]
    %v970 = vld [vmem:[#allocation2 + $0x90] sm:$0xff]
    %v971 = vld [vmem:[#allocation2 + $0x98] sm:$0xff]
    %v972 = vpack.c.bf16 %v967, %v967
    %973 = vmatprep.subr.bf16.mxu0 %v502
    %974 = vmatpush1.bf16.msra.mxu0 %v501
    %975 = vmatprep.subr.bf16.mxu0 %v498
    %976 = vmatpush1.bf16.msra.mxu0 %v497
    %977 = vmatprep.subr.bf16.mxu0 %v494
    %978 = vmatpush1.bf16.msra.mxu0 %v493
    %979 = vmatprep.subr.bf16.mxu0 %v490
    %980 = vmatpush1.bf16.msra.mxu0 %v489
    %981 = vmatprep.subr.bf16.mxu0 %v486
    %982 = vmatpush1.bf16.msra.mxu0 %v485
    %983 = vmatprep.subr.bf16.mxu0 %v482
    %984 = vmatpush1.bf16.msra.mxu0 %v481
    %985 = vmatprep.subr.bf16.mxu0 %v478
    %986 = vmatpush1.bf16.msra.mxu0 %v477
    %987 = vmatprep.subr.bf16.mxu0 %v474
    %988 = vmatpush1.bf16.msra.mxu0 %v473
    %989 = vmatprep.subr.bf16.mxu0 0
    %990 = vmatpush2.bf16.msra.mxu0 0
    %991 = vmatprep.subr.bf16.mxu0 0
    %992 = vmatpush2.bf16.msra.mxu0 0
    %993 = vmatprep.subr.bf16.mxu0 0
    %994 = vmatpush2.bf16.msra.mxu0 0
    %995 = vmatprep.subr.bf16.mxu0 0
    %996 = vmatpush2.bf16.msra.mxu0 0
    %997 = vmatprep.subr.bf16.mxu0 0
    %998 = vmatpush2.bf16.msra.mxu0 0
    %999 = vmatprep.subr.bf16.mxu0 0
    %1000 = vmatpush2.bf16.msra.mxu0 0
    %1001 = vmatprep.subr.bf16.mxu0 0
    %1002 = vmatpush2.bf16.msra.mxu0 0
    %1003 = vmatprep.subr.bf16.mxu0 0
    %1004 = vmatpush2.bf16.msra.mxu0 0
    %1005 = vmatprep.mubr.bf16.mxu0 0
    %1006 = vmatmul.mubr.bf16.gmra.mxu0 %v972
    %v1007 = vpop.f32.mrf.mxu0
    %v1008 = vadd.f32 0.0, %v1007
    %v1009 = vpop.f32.mrf.mxu0
    %v1010 = vadd.f32 0.0, %v1009
    %v1011 = vpop.f32.mrf.mxu0
    %v1012 = vpop.f32.mrf.mxu0
    %1013 = vdwg.mxu0
    %1014 = vmatprep.subr.bf16.mxu0 %v504
    %1015 = vmatpush1.bf16.msra.mxu0 %v503
    %1016 = vmatprep.subr.bf16.mxu0 %v500
    %1017 = vmatpush1.bf16.msra.mxu0 %v499
    %1018 = vmatprep.subr.bf16.mxu0 %v496
    %1019 = vmatpush1.bf16.msra.mxu0 %v495
    %1020 = vmatprep.subr.bf16.mxu0 %v492
    %1021 = vmatpush1.bf16.msra.mxu0 %v491
    %1022 = vmatprep.subr.bf16.mxu0 %v488
    %1023 = vmatpush1.bf16.msra.mxu0 %v487
    %1024 = vmatprep.subr.bf16.mxu0 %v484
    %1025 = vmatpush1.bf16.msra.mxu0 %v483
    %1026 = vmatprep.subr.bf16.mxu0 %v480
    %1027 = vmatpush1.bf16.msra.mxu0 %v479
    %1028 = vmatprep.subr.bf16.mxu0 %v476
    %1029 = vmatpush1.bf16.msra.mxu0 %v475
    %1030 = vmatprep.subr.bf16.mxu0 0
    %1031 = vmatpush2.bf16.msra.mxu0 0
    %1032 = vmatprep.subr.bf16.mxu0 0
    %1033 = vmatpush2.bf16.msra.mxu0 0
    %1034 = vmatprep.subr.bf16.mxu0 0
    %1035 = vmatpush2.bf16.msra.mxu0 0
    %1036 = vmatprep.subr.bf16.mxu0 0
    %1037 = vmatpush2.bf16.msra.mxu0 0
    %1038 = vmatprep.subr.bf16.mxu0 0
    %1039 = vmatpush2.bf16.msra.mxu0 0
    %1040 = vmatprep.subr.bf16.mxu0 0
    %1041 = vmatpush2.bf16.msra.mxu0 0
    %1042 = vmatprep.subr.bf16.mxu0 0
    %1043 = vmatpush2.bf16.msra.mxu0 0
    %1044 = vmatprep.subr.bf16.mxu0 0
    %1045 = vmatpush2.bf16.msra.mxu0 0
    %1046 = vmatprep.mubr.bf16.mxu0 0
    %1047 = vmatmul.mubr.bf16.gmra.mxu0 %v972
    %v1048 = vpop.f32.mrf.mxu0
    %v1049 = vadd.f32 0.0, %v1048
    %v1050 = vpop.f32.mrf.mxu0
    %v1051 = vadd.f32 0.0, %v1050
    %v1052 = vpop.f32.mrf.mxu0
    %v1053 = vpop.f32.mrf.mxu0
    %1054 = vdwg.mxu0
    %v1055 = vadd.f32 %v968, %v1008
    %v1056 = vadd.f32 %v969, %v1010
    %v1057 = vadd.f32 %v970, %v1049
    %v1058 = vadd.f32 %v971, %v1051
    %v1059 = vmul.f32 %v1055, 0.5
    %v1060 = vtanh.pop %v1059
    %v1061 = vmul.f32 %v1060, 0.5
    %v1062 = vadd.f32 %v1061, 0.5
    %v1063 = vmul.f32 %v1056, 0.5
    %v1064 = vtanh.pop %v1063
    %v1065 = vmul.f32 %v1064, 0.5
    %v1066 = vadd.f32 %v1065, 0.5
    %v1067 = vtanh.pop %v1057
    %v1068 = vmul.f32 %v1058, 0.5
    %v1069 = vtanh.pop %v1068
    %v1070 = vmul.f32 %v1069, 0.5
    %v1071 = vadd.f32 %v1070, 0.5
    %v1072 = vmul.f32 %v1066, %v965
    %v1073 = vmul.f32 %v1062, %v1067
    %v1074 = vadd.f32 %v1072, %v1073
    %v1075 = vtanh.pop %v1074
    %v1076 = vmul.f32 %v1071, %v1075
    %v1077 = vld [vmem:[#allocation2 + $0xa0] sm:$0xff]
    %v1078 = vld [vmem:[#allocation2 + $0xa8] sm:$0xff]
    %v1079 = vld [vmem:[#allocation2 + $0xb0] sm:$0xff]
    %v1080 = vld [vmem:[#allocation2 + $0xb8] sm:$0xff]
    %v1081 = vpack.c.bf16 %v1076, %v1076
    %1082 = vmatprep.subr.bf16.mxu0 %v502
    %1083 = vmatpush1.bf16.msra.mxu0 %v501
    %1084 = vmatprep.subr.bf16.mxu0 %v498
    %1085 = vmatpush1.bf16.msra.mxu0 %v497
    %1086 = vmatprep.subr.bf16.mxu0 %v494
    %1087 = vmatpush1.bf16.msra.mxu0 %v493
    %1088 = vmatprep.subr.bf16.mxu0 %v490
    %1089 = vmatpush1.bf16.msra.mxu0 %v489
    %1090 = vmatprep.subr.bf16.mxu0 %v486
    %1091 = vmatpush1.bf16.msra.mxu0 %v485
    %1092 = vmatprep.subr.bf16.mxu0 %v482
    %1093 = vmatpush1.bf16.msra.mxu0 %v481
    %1094 = vmatprep.subr.bf16.mxu0 %v478
    %1095 = vmatpush1.bf16.msra.mxu0 %v477
    %1096 = vmatprep.subr.bf16.mxu0 %v474
    %1097 = vmatpush1.bf16.msra.mxu0 %v473
    %1098 = vmatprep.subr.bf16.mxu0 0
    %1099 = vmatpush2.bf16.msra.mxu0 0
    %1100 = vmatprep.subr.bf16.mxu0 0
    %1101 = vmatpush2.bf16.msra.mxu0 0
    %1102 = vmatprep.subr.bf16.mxu0 0
    %1103 = vmatpush2.bf16.msra.mxu0 0
    %1104 = vmatprep.subr.bf16.mxu0 0
    %1105 = vmatpush2.bf16.msra.mxu0 0
    %1106 = vmatprep.subr.bf16.mxu0 0
    %1107 = vmatpush2.bf16.msra.mxu0 0
    %1108 = vmatprep.subr.bf16.mxu0 0
    %1109 = vmatpush2.bf16.msra.mxu0 0
    %1110 = vmatprep.subr.bf16.mxu0 0
    %1111 = vmatpush2.bf16.msra.mxu0 0
    %1112 = vmatprep.subr.bf16.mxu0 0
    %1113 = vmatpush2.bf16.msra.mxu0 0
    %1114 = vmatprep.mubr.bf16.mxu0 0
    %1115 = vmatmul.mubr.bf16.gmra.mxu0 %v1081
    %v1116 = vpop.f32.mrf.mxu0
    %v1117 = vadd.f32 0.0, %v1116
    %v1118 = vpop.f32.mrf.mxu0
    %v1119 = vadd.f32 0.0, %v1118
    %v1120 = vpop.f32.mrf.mxu0
    %v1121 = vpop.f32.mrf.mxu0
    %1122 = vdwg.mxu0
    %1123 = vmatprep.subr.bf16.mxu0 %v504
    %1124 = vmatpush1.bf16.msra.mxu0 %v503
    %1125 = vmatprep.subr.bf16.mxu0 %v500
    %1126 = vmatpush1.bf16.msra.mxu0 %v499
    %1127 = vmatprep.subr.bf16.mxu0 %v496
    %1128 = vmatpush1.bf16.msra.mxu0 %v495
    %1129 = vmatprep.subr.bf16.mxu0 %v492
    %1130 = vmatpush1.bf16.msra.mxu0 %v491
    %1131 = vmatprep.subr.bf16.mxu0 %v488
    %1132 = vmatpush1.bf16.msra.mxu0 %v487
    %1133 = vmatprep.subr.bf16.mxu0 %v484
    %1134 = vmatpush1.bf16.msra.mxu0 %v483
    %1135 = vmatprep.subr.bf16.mxu0 %v480
    %1136 = vmatpush1.bf16.msra.mxu0 %v479
    %1137 = vmatprep.subr.bf16.mxu0 %v476
    %1138 = vmatpush1.bf16.msra.mxu0 %v475
    %1139 = vmatprep.subr.bf16.mxu0 0
    %1140 = vmatpush2.bf16.msra.mxu0 0
    %1141 = vmatprep.subr.bf16.mxu0 0
    %1142 = vmatpush2.bf16.msra.mxu0 0
    %1143 = vmatprep.subr.bf16.mxu0 0
    %1144 = vmatpush2.bf16.msra.mxu0 0
    %1145 = vmatprep.subr.bf16.mxu0 0
    %1146 = vmatpush2.bf16.msra.mxu0 0
    %1147 = vmatprep.subr.bf16.mxu0 0
    %1148 = vmatpush2.bf16.msra.mxu0 0
    %1149 = vmatprep.subr.bf16.mxu0 0
    %1150 = vmatpush2.bf16.msra.mxu0 0
    %1151 = vmatprep.subr.bf16.mxu0 0
    %1152 = vmatpush2.bf16.msra.mxu0 0
    %1153 = vmatprep.subr.bf16.mxu0 0
    %1154 = vmatpush2.bf16.msra.mxu0 0
    %1155 = vmatprep.mubr.bf16.mxu0 0
    %1156 = vmatmul.mubr.bf16.gmra.mxu0 %v1081
    %v1157 = vpop.f32.mrf.mxu0
    %v1158 = vadd.f32 0.0, %v1157
    %v1159 = vpop.f32.mrf.mxu0
    %v1160 = vadd.f32 0.0, %v1159
    %v1161 = vpop.f32.mrf.mxu0
    %v1162 = vpop.f32.mrf.mxu0
    %1163 = vdwg.mxu0
    %v1164 = vadd.f32 %v1077, %v1117
    %v1165 = vadd.f32 %v1078, %v1119
    %v1166 = vadd.f32 %v1079, %v1158
    %v1167 = vadd.f32 %v1080, %v1160
    %v1168 = vmul.f32 %v1164, 0.5
    %v1169 = vtanh.pop %v1168
    %v1170 = vmul.f32 %v1169, 0.5
    %v1171 = vadd.f32 %v1170, 0.5
    %v1172 = vmul.f32 %v1165, 0.5
    %v1173 = vtanh.pop %v1172
    %v1174 = vmul.f32 %v1173, 0.5
    %v1175 = vadd.f32 %v1174, 0.5
    %v1176 = vtanh.pop %v1166
    %v1177 = vmul.f32 %v1167, 0.5
    %v1178 = vtanh.pop %v1177
    %v1179 = vmul.f32 %v1178, 0.5
    %v1180 = vadd.f32 %v1179, 0.5
    %v1181 = vmul.f32 %v1175, %v1074
    %v1182 = vmul.f32 %v1171, %v1176
    %v1183 = vadd.f32 %v1181, %v1182
    %v1184 = vtanh.pop %v1183
    %v1185 = vmul.f32 %v1180, %v1184
    %v1186 = vld [vmem:[#allocation2 + $0xc0] sm:$0xff]
    %v1187 = vld [vmem:[#allocation2 + $0xc8] sm:$0xff]
    %v1188 = vld [vmem:[#allocation2 + $0xd0] sm:$0xff]
    %v1189 = vld [vmem:[#allocation2 + $0xd8] sm:$0xff]
    %v1190 = vpack.c.bf16 %v1185, %v1185
    %1191 = vmatprep.subr.bf16.mxu0 %v502
    %1192 = vmatpush1.bf16.msra.mxu0 %v501
    %1193 = vmatprep.subr.bf16.mxu0 %v498
    %1194 = vmatpush1.bf16.msra.mxu0 %v497
    %1195 = vmatprep.subr.bf16.mxu0 %v494
    %1196 = vmatpush1.bf16.msra.mxu0 %v493
    %1197 = vmatprep.subr.bf16.mxu0 %v490
    %1198 = vmatpush1.bf16.msra.mxu0 %v489
    %1199 = vmatprep.subr.bf16.mxu0 %v486
    %1200 = vmatpush1.bf16.msra.mxu0 %v485
    %1201 = vmatprep.subr.bf16.mxu0 %v482
    %1202 = vmatpush1.bf16.msra.mxu0 %v481
    %1203 = vmatprep.subr.bf16.mxu0 %v478
    %1204 = vmatpush1.bf16.msra.mxu0 %v477
    %1205 = vmatprep.subr.bf16.mxu0 %v474
    %1206 = vmatpush1.bf16.msra.mxu0 %v473
    %1207 = vmatprep.subr.bf16.mxu0 0
    %1208 = vmatpush2.bf16.msra.mxu0 0
    %1209 = vmatprep.subr.bf16.mxu0 0
    %1210 = vmatpush2.bf16.msra.mxu0 0
    %1211 = vmatprep.subr.bf16.mxu0 0
    %1212 = vmatpush2.bf16.msra.mxu0 0
    %1213 = vmatprep.subr.bf16.mxu0 0
    %1214 = vmatpush2.bf16.msra.mxu0 0
    %1215 = vmatprep.subr.bf16.mxu0 0
    %1216 = vmatpush2.bf16.msra.mxu0 0
    %1217 = vmatprep.subr.bf16.mxu0 0
    %1218 = vmatpush2.bf16.msra.mxu0 0
    %1219 = vmatprep.subr.bf16.mxu0 0
    %1220 = vmatpush2.bf16.msra.mxu0 0
    %1221 = vmatprep.subr.bf16.mxu0 0
    %1222 = vmatpush2.bf16.msra.mxu0 0
    %1223 = vmatprep.mubr.bf16.mxu0 0
    %1224 = vmatmul.mubr.bf16.gmra.mxu0 %v1190
    %v1225 = vpop.f32.mrf.mxu0
    %v1226 = vadd.f32 0.0, %v1225
    %v1227 = vpop.f32.mrf.mxu0
    %v1228 = vadd.f32 0.0, %v1227
    %v1229 = vpop.f32.mrf.mxu0
    %v1230 = vpop.f32.mrf.mxu0
    %1231 = vdwg.mxu0
    %1232 = vmatprep.subr.bf16.mxu0 %v504
    %1233 = vmatpush1.bf16.msra.mxu0 %v503
    %1234 = vmatprep.subr.bf16.mxu0 %v500
    %1235 = vmatpush1.bf16.msra.mxu0 %v499
    %1236 = vmatprep.subr.bf16.mxu0 %v496
    %1237 = vmatpush1.bf16.msra.mxu0 %v495
    %1238 = vmatprep.subr.bf16.mxu0 %v492
    %1239 = vmatpush1.bf16.msra.mxu0 %v491
    %1240 = vmatprep.subr.bf16.mxu0 %v488
    %1241 = vmatpush1.bf16.msra.mxu0 %v487
    %1242 = vmatprep.subr.bf16.mxu0 %v484
    %1243 = vmatpush1.bf16.msra.mxu0 %v483
    %1244 = vmatprep.subr.bf16.mxu0 %v480
    %1245 = vmatpush1.bf16.msra.mxu0 %v479
    %1246 = vmatprep.subr.bf16.mxu0 %v476
    %1247 = vmatpush1.bf16.msra.mxu0 %v475
    %1248 = vmatprep.subr.bf16.mxu0 0
    %1249 = vmatpush2.bf16.msra.mxu0 0
    %1250 = vmatprep.subr.bf16.mxu0 0
    %1251 = vmatpush2.bf16.msra.mxu0 0
    %1252 = vmatprep.subr.bf16.mxu0 0
    %1253 = vmatpush2.bf16.msra.mxu0 0
    %1254 = vmatprep.subr.bf16.mxu0 0
    %1255 = vmatpush2.bf16.msra.mxu0 0
    %1256 = vmatprep.subr.bf16.mxu0 0
    %1257 = vmatpush2.bf16.msra.mxu0 0
    %1258 = vmatprep.subr.bf16.mxu0 0
    %1259 = vmatpush2.bf16.msra.mxu0 0
    %1260 = vmatprep.subr.bf16.mxu0 0
    %1261 = vmatpush2.bf16.msra.mxu0 0
    %1262 = vmatprep.subr.bf16.mxu0 0
    %1263 = vmatpush2.bf16.msra.mxu0 0
    %1264 = vmatprep.mubr.bf16.mxu0 0
    %1265 = vmatmul.mubr.bf16.gmra.mxu0 %v1190
    %v1266 = vpop.f32.mrf.mxu0
    %v1267 = vadd.f32 0.0, %v1266
    %v1268 = vpop.f32.mrf.mxu0
    %v1269 = vadd.f32 0.0, %v1268
    %v1270 = vpop.f32.mrf.mxu0
    %v1271 = vpop.f32.mrf.mxu0
    %1272 = vdwg.mxu0
    %v1273 = vadd.f32 %v1186, %v1226
    %v1274 = vadd.f32 %v1187, %v1228
    %v1275 = vadd.f32 %v1188, %v1267
    %v1276 = vadd.f32 %v1189, %v1269
    %v1277 = vmul.f32 %v1273, 0.5
    %v1278 = vtanh.pop %v1277
    %v1279 = vmul.f32 %v1278, 0.5
    %v1280 = vadd.f32 %v1279, 0.5
    %v1281 = vmul.f32 %v1274, 0.5
    %v1282 = vtanh.pop %v1281
    %v1283 = vmul.f32 %v1282, 0.5
    %v1284 = vadd.f32 %v1283, 0.5
    %v1285 = vtanh.pop %v1275
    %v1286 = vmul.f32 %v1276, 0.5
    %v1287 = vtanh.pop %v1286
    %v1288 = vmul.f32 %v1287, 0.5
    %v1289 = vadd.f32 %v1288, 0.5
    %v1290 = vmul.f32 %v1284, %v1183
    %v1291 = vmul.f32 %v1280, %v1285
    %v1292 = vadd.f32 %v1290, %v1291
    %v1293 = vtanh.pop %v1292
    %v1294 = vmul.f32 %v1289, %v1293
    %v1295 = vld [vmem:[#allocation2 + $0xe0] sm:$0xff]
    %v1296 = vld [vmem:[#allocation2 + $0xe8] sm:$0xff]
    %v1297 = vld [vmem:[#allocation2 + $0xf0] sm:$0xff]
    %v1298 = vld [vmem:[#allocation2 + $0xf8] sm:$0xff]
    %v1299 = vpack.c.bf16 %v1294, %v1294
    %1300 = vmatprep.subr.bf16.mxu0 %v502
    %1301 = vmatpush1.bf16.msra.mxu0 %v501
    %1302 = vmatprep.subr.bf16.mxu0 %v498
    %1303 = vmatpush1.bf16.msra.mxu0 %v497
    %1304 = vmatprep.subr.bf16.mxu0 %v494
    %1305 = vmatpush1.bf16.msra.mxu0 %v493
    %1306 = vmatprep.subr.bf16.mxu0 %v490
    %1307 = vmatpush1.bf16.msra.mxu0 %v489
    %1308 = vmatprep.subr.bf16.mxu0 %v486
    %1309 = vmatpush1.bf16.msra.mxu0 %v485
    %1310 = vmatprep.subr.bf16.mxu0 %v482
    %1311 = vmatpush1.bf16.msra.mxu0 %v481
    %1312 = vmatprep.subr.bf16.mxu0 %v478
    %1313 = vmatpush1.bf16.msra.mxu0 %v477
    %1314 = vmatprep.subr.bf16.mxu0 %v474
    %1315 = vmatpush1.bf16.msra.mxu0 %v473
    %1316 = vmatprep.subr.bf16.mxu0 0
    %1317 = vmatpush2.bf16.msra.mxu0 0
    %1318 = vmatprep.subr.bf16.mxu0 0
    %1319 = vmatpush2.bf16.msra.mxu0 0
    %1320 = vmatprep.subr.bf16.mxu0 0
    %1321 = vmatpush2.bf16.msra.mxu0 0
    %1322 = vmatprep.subr.bf16.mxu0 0
    %1323 = vmatpush2.bf16.msra.mxu0 0
    %1324 = vmatprep.subr.bf16.mxu0 0
    %1325 = vmatpush2.bf16.msra.mxu0 0
    %1326 = vmatprep.subr.bf16.mxu0 0
    %1327 = vmatpush2.bf16.msra.mxu0 0
    %1328 = vmatprep.subr.bf16.mxu0 0
    %1329 = vmatpush2.bf16.msra.mxu0 0
    %1330 = vmatprep.subr.bf16.mxu0 0
    %1331 = vmatpush2.bf16.msra.mxu0 0
    %1332 = vmatprep.mubr.bf16.mxu0 0
    %1333 = vmatmul.mubr.bf16.gmra.mxu0 %v1299
    %v1334 = vpop.f32.mrf.mxu0
    %v1335 = vadd.f32 0.0, %v1334
    %v1336 = vpop.f32.mrf.mxu0
    %v1337 = vadd.f32 0.0, %v1336
    %v1338 = vpop.f32.mrf.mxu0
    %v1339 = vpop.f32.mrf.mxu0
    %1340 = vdwg.mxu0
    %1341 = vmatprep.subr.bf16.mxu0 %v504
    %1342 = vmatpush1.bf16.msra.mxu0 %v503
    %1343 = vmatprep.subr.bf16.mxu0 %v500
    %1344 = vmatpush1.bf16.msra.mxu0 %v499
    %1345 = vmatprep.subr.bf16.mxu0 %v496
    %1346 = vmatpush1.bf16.msra.mxu0 %v495
    %1347 = vmatprep.subr.bf16.mxu0 %v492
    %1348 = vmatpush1.bf16.msra.mxu0 %v491
    %1349 = vmatprep.subr.bf16.mxu0 %v488
    %1350 = vmatpush1.bf16.msra.mxu0 %v487
    %1351 = vmatprep.subr.bf16.mxu0 %v484
    %1352 = vmatpush1.bf16.msra.mxu0 %v483
    %1353 = vmatprep.subr.bf16.mxu0 %v480
    %1354 = vmatpush1.bf16.msra.mxu0 %v479
    %1355 = vmatprep.subr.bf16.mxu0 %v476
    %1356 = vmatpush1.bf16.msra.mxu0 %v475
    %1357 = vmatprep.subr.bf16.mxu0 0
    %1358 = vmatpush2.bf16.msra.mxu0 0
    %1359 = vmatprep.subr.bf16.mxu0 0
    %1360 = vmatpush2.bf16.msra.mxu0 0
    %1361 = vmatprep.subr.bf16.mxu0 0
    %1362 = vmatpush2.bf16.msra.mxu0 0
    %1363 = vmatprep.subr.bf16.mxu0 0
    %1364 = vmatpush2.bf16.msra.mxu0 0
    %1365 = vmatprep.subr.bf16.mxu0 0
    %1366 = vmatpush2.bf16.msra.mxu0 0
    %1367 = vmatprep.subr.bf16.mxu0 0
    %1368 = vmatpush2.bf16.msra.mxu0 0
    %1369 = vmatprep.subr.bf16.mxu0 0
    %1370 = vmatpush2.bf16.msra.mxu0 0
    %1371 = vmatprep.subr.bf16.mxu0 0
    %1372 = vmatpush2.bf16.msra.mxu0 0
    %1373 = vmatprep.mubr.bf16.mxu0 0
    %1374 = vmatmul.mubr.bf16.gmra.mxu0 %v1299
    %v1375 = vpop.f32.mrf.mxu0
    %v1376 = vadd.f32 0.0, %v1375
    %v1377 = vpop.f32.mrf.mxu0
    %v1378 = vadd.f32 0.0, %v1377
    %v1379 = vpop.f32.mrf.mxu0
    %v1380 = vpop.f32.mrf.mxu0
    %1381 = vdwg.mxu0
    %v1382 = vadd.f32 %v1295, %v1335
    %v1383 = vadd.f32 %v1296, %v1337
    %v1384 = vadd.f32 %v1297, %v1376
    %v1385 = vadd.f32 %v1298, %v1378
    %v1386 = vmul.f32 %v1382, 0.5
    %v1387 = vtanh.pop %v1386
    %v1388 = vmul.f32 %v1387, 0.5
    %v1389 = vadd.f32 %v1388, 0.5
    %v1390 = vmul.f32 %v1383, 0.5
    %v1391 = vtanh.pop %v1390
    %v1392 = vmul.f32 %v1391, 0.5
    %v1393 = vadd.f32 %v1392, 0.5
    %v1394 = vtanh.pop %v1384
    %v1395 = vmul.f32 %v1385, 0.5
    %v1396 = vtanh.pop %v1395
    %v1397 = vmul.f32 %v1396, 0.5
    %v1398 = vadd.f32 %v1397, 0.5
    %v1399 = vmul.f32 %v1393, %v1292
    %v1400 = vmul.f32 %v1389, %v1394
    %v1401 = vadd.f32 %v1399, %v1400
    %v1402 = vtanh.pop %v1401
    %v1403 = vmul.f32 %v1398, %v1402
    %v1404 = vpack.c.bf16 %v1403, %v1403
    %v1405 = vld [vmem:[%s4] sm:$0xf]
    %v1406 = vld [vmem:[%s4 + $0x4] sm:$0xf]
    %v1407 = vld [vmem:[%s4 + $0x8] sm:$0xf]
    %v1408 = vld [vmem:[%s4 + $0xc] sm:$0xf]
    %v1409 = vld [vmem:[%s4 + $0x10] sm:$0xf]
    %v1410 = vld [vmem:[%s4 + $0x14] sm:$0xf]
    %v1411 = vld [vmem:[%s4 + $0x18] sm:$0xf]
    %v1412 = vld [vmem:[%s4 + $0x1c] sm:$0xf]
    %v1413 = vld [vmem:[%s4 + $0x20] sm:$0xf]
    %v1414 = vld [vmem:[%s4 + $0x24] sm:$0xf]
    %v1415 = vld [vmem:[%s4 + $0x28] sm:$0xf]
    %v1416 = vld [vmem:[%s4 + $0x2c] sm:$0xf]
    %v1417 = vld [vmem:[%s4 + $0x30] sm:$0xf]
    %v1418 = vld [vmem:[%s4 + $0x34] sm:$0xf]
    %v1419 = vld [vmem:[%s4 + $0x38] sm:$0xf]
    %v1420 = vld [vmem:[%s4 + $0x3c] sm:$0xf]
    %v1421 = vld [vmem:[%s5] sm:$0x1]
    %v1423 = vlaneseq
    %v1424 = vshrl.u32 %v1423, 7
    %v1425 = vsub.s32 0, %v1424
    %v1426 = vrot.slane %v1421, %v1425
    %v1444 = vunpack.c.l.b16 %v1405
    %v1445 = vunpack.c.l.b16 %v1406
    %v1446 = vunpack.c.l.b16 %v1407
    %v1447 = vunpack.c.l.b16 %v1408
    %v1448 = vunpack.c.l.b16 %v1409
    %v1449 = vunpack.c.l.b16 %v1410
    %v1450 = vunpack.c.l.b16 %v1411
    %v1451 = vunpack.c.l.b16 %v1412
    %v1452 = vunpack.c.l.b16 %v1413
    %v1453 = vunpack.c.l.b16 %v1414
    %v1454 = vunpack.c.l.b16 %v1415
    %v1455 = vunpack.c.l.b16 %v1416
    %v1456 = vunpack.c.l.b16 %v1417
    %v1457 = vunpack.c.l.b16 %v1418
    %v1458 = vunpack.c.l.b16 %v1419
    %v1459 = vunpack.c.l.b16 %v1420
    %v1460 = vpack.c.b16 %v1445, %v1444
    %v1461 = vpack.c.b16 %v1447, %v1446
    %v1462 = vpack.c.b16 %v1449, %v1448
    %v1463 = vpack.c.b16 %v1451, %v1450
    %v1464 = vpack.c.b16 %v1453, %v1452
    %v1465 = vpack.c.b16 %v1455, %v1454
    %v1466 = vpack.c.b16 %v1457, %v1456
    %v1467 = vpack.c.b16 %v1459, %v1458
    %1476 = vmatprep.subr.bf16.mxu0 0
    %1477 = vmatpush1.bf16.msra.mxu0 %v1467
    %1478 = vmatprep.subr.bf16.mxu0 0
    %1479 = vmatpush1.bf16.msra.mxu0 %v1466
    %1480 = vmatprep.subr.bf16.mxu0 0
    %1481 = vmatpush1.bf16.msra.mxu0 %v1465
    %1482 = vmatprep.subr.bf16.mxu0 0
    %1483 = vmatpush1.bf16.msra.mxu0 %v1464
    %1484 = vmatprep.subr.bf16.mxu0 0
    %1485 = vmatpush1.bf16.msra.mxu0 %v1463
    %1486 = vmatprep.subr.bf16.mxu0 0
    %1487 = vmatpush1.bf16.msra.mxu0 %v1462
    %1488 = vmatprep.subr.bf16.mxu0 0
    %1489 = vmatpush1.bf16.msra.mxu0 %v1461
    %1490 = vmatprep.subr.bf16.mxu0 0
    %1491 = vmatpush1.bf16.msra.mxu0 %v1460
    %1492 = vmatprep.subr.bf16.mxu0 0
    %1493 = vmatpush2.bf16.msra.mxu0 0
    %1494 = vmatprep.subr.bf16.mxu0 0
    %1495 = vmatpush2.bf16.msra.mxu0 0
    %1496 = vmatprep.subr.bf16.mxu0 0
    %1497 = vmatpush2.bf16.msra.mxu0 0
    %1498 = vmatprep.subr.bf16.mxu0 0
    %1499 = vmatpush2.bf16.msra.mxu0 0
    %1500 = vmatprep.subr.bf16.mxu0 0
    %1501 = vmatpush2.bf16.msra.mxu0 0
    %1502 = vmatprep.subr.bf16.mxu0 0
    %1503 = vmatpush2.bf16.msra.mxu0 0
    %1504 = vmatprep.subr.bf16.mxu0 0
    %1505 = vmatpush2.bf16.msra.mxu0 0
    %1506 = vmatprep.subr.bf16.mxu0 0
    %1507 = vmatpush2.bf16.msra.mxu0 0
    %1508 = vmatprep.mubr.bf16.mxu0 0
    %1509 = vmatmul.mubr.bf16.gmra.mxu0 %v1404
    %v1510 = vpop.f32.mrf.mxu0
    %v1511 = vadd.f32 %v1426, %v1510
    %v1512 = vpop.f32.mrf.mxu0
    %v1513 = vpop.f32.mrf.mxu0
    %v1514 = vpop.f32.mrf.mxu0
    %1515 = vdwg.mxu0
    %1516 = vst [vmem:[%s6] sm:$0xff] %v1511
    // Predicated region
    $region34: #{forward.1} parent=1 // pred_check
      _
    $region35: #{forward.1} parent=1 // pred_check_branch
      %1518 = sbr.rel (0) target = $region37
    $region36: #{forward.1} parent=1 // pred_region
      _
    $region37: #{forward.1} parent=1 // pred_fallthru
      _
    // Predicated region
    $region38: #{forward.1} parent=1 // pred_check
      _
    $region39: #{forward.1} parent=1 // pred_check_branch
      %1520 = sbr.rel (0) target = $region41
    $region40: #{forward.1} parent=1 // pred_region
      _
    $region41: #{forward.1} parent=1 // pred_fallthru
      _
    %1521 = vsyncpa [#allocation4], 1
    %1522 = vsyncpa [#allocation6], 1

</llo_original>
